<compile_context>
chip_gen: v7x
topology: tpu7x:2x2x1
jax: 0.10.0
libtpu: 0.0.40
codegen_flags: <defaults>
</compile_context>

<pallas_src>
import functools

import jax
import jax.numpy as jnp
from jax import lax
from jax.experimental import pallas as pl
from jax.experimental.pallas import tpu as pltpu

_MXU_DTYPE = jnp.bfloat16     # operand dtype at the MXU / HBM boundary (f32 accumulation)


@functools.lru_cache(maxsize=1)
def _vmem_limit_bytes():
    # Generation-aware scoped-VMEM limit: ~3/4 of physical, capped at 96 MiB
    # (v5e/v6e: 128 MiB physical -> 96 MiB; v7x: 64 MiB physical -> 48 MiB).
    try:
        cap = int(pltpu.get_tpu_info().vmem_capacity_bytes)
        return int(min(cap * 3 // 4, 96 * 1024 * 1024))
    except Exception:
        return 32 * 1024 * 1024


# ----------------------------- tiled linear ---------------------------------

def _linear_kernel(x_ref, w_ref, b_ref, o_ref, acc_ref):
    # o = x @ w.T + b   (x: [tm, tk], w: [tn, tk], b: [1, tn], o/acc: [tm, tn])
    @pl.when(pl.program_id(2) == 0)
    def _():
        acc_ref[...] = jnp.zeros_like(acc_ref)

    acc_ref[...] += lax.dot_general(
        x_ref[...].astype(_MXU_DTYPE), w_ref[...].astype(_MXU_DTYPE),
        (((1,), (1,)), ((), ())), preferred_element_type=jnp.float32)

    @pl.when(pl.program_id(2) == pl.num_programs(2) - 1)
    def _():
        o_ref[...] = (acc_ref[...] + b_ref[...]).astype(o_ref.dtype)


def _pick_tile(dim, prefs):
    # Prefer large aligned tiles that divide the dim; otherwise use the full dim
    # (always satisfies the (8,128)-or-full-dim BlockSpec rule).
    for p in prefs:
        if dim >= p and dim % p == 0:
            return p
    return dim


def pallas_linear(x, w, b, *, out_dtype=None):
    """x: [N, In], w: [Out, In], b: [Out]  ->  x @ w.T + b  : [N, Out]."""
    N, In = x.shape
    Out, In2 = w.shape
    assert In == In2
    out_dtype = x.dtype if out_dtype is None else out_dtype
    tm = _pick_tile(N, (512, 256, 128))
    tn = _pick_tile(Out, (512, 256, 128))
    tk = _pick_tile(In, (1024, 512, 256, 128))
    grid = (pl.cdiv(N, tm), pl.cdiv(Out, tn), pl.cdiv(In, tk))
    return pl.pallas_call(
        _linear_kernel,
        out_shape=jax.ShapeDtypeStruct((N, Out), out_dtype),
        grid=grid,
        in_specs=[
            pl.BlockSpec((tm, tk), lambda i, j, k: (i, k)),
            pl.BlockSpec((tn, tk), lambda i, j, k: (j, k)),
            pl.BlockSpec((1, tn), lambda i, j, k: (0, j)),
        ],
        out_specs=pl.BlockSpec((tm, tn), lambda i, j, k: (i, j)),
        scratch_shapes=[pltpu.VMEM((tm, tn), jnp.float32)],
        compiler_params=pltpu.CompilerParams(
            dimension_semantics=("parallel", "parallel", "arbitrary"),
            vmem_limit_bytes=_vmem_limit_bytes()),
    )(x, w, b.reshape(1, Out).astype(jnp.float32))


# --------------------------- fused RoPE attention ----------------------------

def _pick_q_tile(T, H, budget=6 * 1024 * 1024):
    """Largest q-tile dividing T whose [H, tq, T] f32 score buffer fits the budget."""
    if T <= 128:
        return T
    best = None
    for tq in (256, 128, 64, 32, 16, 8):
        if T % tq == 0:
            if best is None:
                best = tq
            if H * tq * T * 4 <= budget:
                return tq
    return best if best is not None else T


def _make_attn_kernel(num_heads, head_dim, tq, has_mask, need_weights):
    H, hd = num_heads, head_dim
    hd2 = hd // 2
    inv_h = 1.0 / float(H)

    def kernel(*refs):
        q_ref, k_ref, v_ref, cq_ref, sq_ref, ck_ref, sk_ref = refs[:7]
        idx = 7
        mask_ref = None
        if has_mask:
            mask_ref = refs[7]
            idx = 8
        o_ref = refs[idx]
        w_ref = refs[idx + 1] if need_weights else None

        T = k_ref.shape[1]

        # q/k arrive pre-scaled and with each head's channels permuted to
        # [even half | odd half], so RoPE is applied on two contiguous halves.
        # Head split is done head-major ([H, rows, hd]) so the dots below are
        # plain leading-batch-dim einsums (same pattern as the flash reference).
        q4 = jnp.swapaxes(q_ref[0].reshape(tq, H, hd), 0, 1).astype(jnp.float32)
        k4 = jnp.swapaxes(k_ref[0].reshape(T, H, hd), 0, 1).astype(jnp.float32)

        cq = cq_ref[...][None, :, :]      # [1, tq, hd2] f32
        sq = sq_ref[...][None, :, :]
        ck = ck_ref[...][None, :, :]      # [1, T, hd2] f32
        sk = sk_ref[...][None, :, :]

        qe, qo = q4[..., :hd2], q4[..., hd2:]
        ke, ko = k4[..., :hd2], k4[..., hd2:]
        # complex rotation (e + i*o) * (cos + i*sin); scores = Re(q2 @ conj(k2).T)
        # which is a SINGLE dot of the rotated vectors [re | im] over head_dim.
        q_rot = jnp.concatenate([qe * cq - qo * sq, qe * sq + qo * cq], axis=-1)
        k_rot = jnp.concatenate([ke * ck - ko * sk, ke * sk + ko * ck], axis=-1)

        s = jnp.einsum('hqd,hkd->hqk',
                       q_rot.astype(_MXU_DTYPE), k_rot.astype(_MXU_DTYPE),
                       preferred_element_type=jnp.float32)        # [H, tq, T] f32
        if has_mask:
            # The module adds the mask arithmetically (float additive mask).
            s = s + mask_ref[...][None, :, :]

        # numerically stable softmax over the key axis, exact normalization (f32)
        s = s - jnp.max(s, axis=-1, keepdims=True)
        e = jnp.exp(s)
        p = e / jnp.sum(e, axis=-1, keepdims=True)                # [H, tq, T] f32

        if need_weights:
            # head-averaged attention weights: one lane-dense [tq, T] store per step
            w_ref[0] = (jnp.sum(p, axis=0) * inv_h).astype(w_ref.dtype)

        # PV matmul, batched over heads; single lane-dense [tq, E] store
        v4 = jnp.swapaxes(v_ref[0].reshape(T, H, hd), 0, 1)       # [H, T, hd] bf16
        o = jnp.einsum('hqk,hkd->hqd',
                       p.astype(_MXU_DTYPE), v4.astype(_MXU_DTYPE),
                       preferred_element_type=jnp.float32)        # [H, tq, hd]
        o_ref[0] = jnp.swapaxes(o, 0, 1).reshape(tq, H * hd).astype(o_ref.dtype)

    return kernel


def pallas_rope_attention(qkv, cos, sin, attn_mask, *, num_heads, need_weights=True):
    """qkv: [bsz, T, 3E] (bf16; q pre-scaled, q/k channels permuted per head to
    [even|odd] halves).  cos/sin: [T, hd//2] f32.  attn_mask: [T, T] additive or None.
    Returns (attn [bsz, T, E] bf16, head-averaged weights [bsz, T, T] f32 or None)."""
    bsz, T, threeE = qkv.shape
    E = threeE // 3
    H = num_heads
    hd = E // H
    tq = _pick_q_tile(T, H)
    n_qt = T // tq
    has_mask = attn_mask is not None

    # TODO(synk): for very long T, also tile the key/value axis with online softmax;
    # the returned per-row softmax weights make a pure flash recurrence awkward, so
    # this version keeps full-K rows per step (VMEM is O(tq*T + T*E), sized above).
    if E % 128 == 0:
        # fused qkv: pass the same [B, T, 3E] array three times with column blocks
        q_in = k_in = v_in = qkv
        q_spec = pl.BlockSpec((1, tq, E), lambda b, qi: (b, qi, 0))
        k_spec = pl.BlockSpec((1, T, E), lambda b, qi: (b, 0, 1))
        v_spec = pl.BlockSpec((1, T, E), lambda b, qi: (b, 0, 2))
    else:
        # small-E fallback: an E-wide block of a 3E-wide array would violate the
        # (8,128)-or-full-dim lane rule, so split once in the wrapper.
        q_in, k_in, v_in = jnp.split(qkv, 3, axis=-1)
        q_spec = pl.BlockSpec((1, tq, E), lambda b, qi: (b, qi, 0))
        k_spec = pl.BlockSpec((1, T, E), lambda b, qi: (b, 0, 0))
        v_spec = pl.BlockSpec((1, T, E), lambda b, qi: (b, 0, 0))

    cq_spec = pl.BlockSpec((tq, hd // 2), lambda b, qi: (qi, 0))   # q rows of R
    ck_spec = pl.BlockSpec((T, hd // 2), lambda b, qi: (0, 0))     # all rows (for k)

    in_specs = [q_spec, k_spec, v_spec, cq_spec, cq_spec, ck_spec, ck_spec]
    args = [q_in, k_in, v_in, cos, sin, cos, sin]
    if has_mask:
        in_specs.append(pl.BlockSpec((tq, T), lambda b, qi: (qi, 0)))
        args.append(attn_mask.astype(jnp.float32))

    o_shape = jax.ShapeDtypeStruct((bsz, T, E), _MXU_DTYPE)
    o_spec = pl.BlockSpec((1, tq, E), lambda b, qi: (b, qi, 0))
    if need_weights:
        out_shape = (o_shape, jax.ShapeDtypeStruct((bsz, T, T), jnp.float32))
        out_specs = (o_spec, pl.BlockSpec((1, tq, T), lambda b, qi: (b, qi, 0)))
    else:
        out_shape = o_shape
        out_specs = o_spec

    result = pl.pallas_call(
        _make_attn_kernel(H, hd, tq, has_mask, need_weights),
        out_shape=out_shape,
        grid=(bsz, n_qt),
        in_specs=in_specs,
        out_specs=out_specs,
        compiler_params=pltpu.CompilerParams(
            dimension_semantics=("parallel", "parallel"),
            vmem_limit_bytes=_vmem_limit_bytes()),
    )(*args)

    if need_weights:
        return result
    return result, None


# ------------------------------ RoPE matrix ----------------------------------

def get_rope_matrix(seq_length, head_dim, patch_number, target_number):
    # TODO(synk): the original Fibonacci / 2D-patch get_rope_matrix is not defined in
    # the provided source; standard deterministic RoPE angles are used as a placeholder.
    del patch_number, target_number
    d = jnp.arange(head_dim, dtype=jnp.float32)
    theta = 10000.0 ** (-d / float(head_dim))
    pos = jnp.arange(seq_length, dtype=jnp.float32)[:, None]
    ang = pos * theta[None, :]
    return jnp.cos(ang), jnp.sin(ang)   # real / imag parts of R, each [T, hd//2]


# ----------------------------- module forward --------------------------------

def _rope_head_permutation(embed_dim, num_heads):
    hd = embed_dim // num_heads
    base = jnp.concatenate([jnp.arange(0, hd, 2), jnp.arange(1, hd, 2)])
    return (jnp.arange(num_heads)[:, None] * hd + base[None, :]).reshape(-1)


def multihead_attention_forward(query, key, value, params, *, num_heads, pic_size,
                                patch_size, target_number=10, attn_mask=None,
                                need_weights=True):
    """Replicates MultiheadAttention.forward for the self-attention (qkv_same) case.
    Returns (attn [bsz, T, E] f32, head-averaged attn_weights [bsz, T, T] f32)."""
    del key, value  # qkv_same path: all projections come from `query`
    bsz, T, E = query.shape
    H = num_heads
    hd = E // H
    assert hd * H == E and hd % 2 == 0
    scaling = hd ** (-0.5)

    W_in, b_in = params["in_proj_weight"], params["in_proj_bias"]
    W_out, b_out = params["out_proj_weight"], params["out_proj_bias"]

    # Fold `q *= scaling` and the per-head even/odd de-interleave (needed by RoPE)
    # into the q/k rows of the in-projection weights: a one-time weight-side
    # transform, so the activations never go through stride-2 gathers.
    perm = _rope_head_permutation(E, H)
    W_q = W_in[:E][perm] * scaling
    b_q = b_in[:E][perm] * scaling
    W_k = W_in[E:2 * E][perm]
    b_k = b_in[E:2 * E][perm]
    W_v, b_v = W_in[2 * E:], b_in[2 * E:]
    W_in_adj = jnp.concatenate([W_q, W_k, W_v], axis=0).astype(_MXU_DTYPE)
    b_in_adj = jnp.concatenate([b_q, b_k, b_v], axis=0)

    # fused in-projection (tiled Pallas matmul), bf16 in / bf16 out, f32 accumulate
    x2d = query.reshape(bsz * T, E).astype(_MXU_DTYPE)
    qkv = pallas_linear(x2d, W_in_adj, b_in_adj,
                        out_dtype=_MXU_DTYPE).reshape(bsz, T, 3 * E)

    patch_number = (pic_size[0] // patch_size[0], pic_size[1] // patch_size[1])
    cos, sin = get_rope_matrix(T, hd // 2, patch_number, target_number)

    # NOTE: the module applies the mask additively (`attn_weights += attn_mask`).
    # TODO(synk): attention dropout omitted (attn_dropout=0.0 in the default config).
    attn, attn_weights = pallas_rope_attention(
        qkv, cos, sin, attn_mask, num_heads=H, need_weights=need_weights)

    # output projection (tiled Pallas matmul), f32 output to match the module
    out = pallas_linear(attn.reshape(bsz * T, E), W_out.astype(_MXU_DTYPE), b_out,
                        out_dtype=jnp.float32).reshape(bsz, T, E)
    return out, attn_weights


# ----------------------------- parameter init --------------------------------

def xavier_uniform(key, shape):
    fan_out, fan_in = shape
    bound = (6.0 / (fan_in + fan_out)) ** 0.5
    return jax.random.uniform(key, shape, jnp.float32, -bound, bound)


def init_params(key, embed_dim):
    k1, k2 = jax.random.split(key)
    return {
        "in_proj_weight": xavier_uniform(k1, (3 * embed_dim, embed_dim)),
        "in_proj_bias": jnp.zeros((3 * embed_dim,), jnp.float32),
        "out_proj_weight": xavier_uniform(k2, (embed_dim, embed_dim)),
        "out_proj_bias": jnp.zeros((embed_dim,), jnp.float32),
    }


# ---------------------------------- main --------------------------------------

if __name__ == "__main__":
    embed_dim = 32
    num_heads = 4
    bsz, seq_len = 2, 8
    pic_size = (16, 16)
    patch_size = (4, 4)

    root = jax.random.PRNGKey(0)
    kx, kp = jax.random.split(root)
    x = jax.random.normal(kx, (bsz, seq_len, embed_dim), jnp.float32)
    params = init_params(kp, embed_dim)

    fwd = jax.jit(functools.partial(
        multihead_attention_forward,
        num_heads=num_heads, pic_size=pic_size, patch_size=patch_size,
        target_number=10))

    attn, attn_weights = fwd(x, x, x, params)   # self-attention (qkv_same)
    jax.block_until_ready((attn, attn_weights))

    assert attn.shape == (bsz, seq_len, embed_dim)
    assert attn_weights.shape == (bsz, seq_len, seq_len)
    print("KERNEL_OK")
</pallas_src>

<mosaic_0001>
module attributes {stable_mosaic.version = 11 : i64} {
  func.func @_linear_kernel(%arg0: i32, %arg1: i32, %arg2: i32, %arg3: memref<16x32xbf16, #tpu.memory_space<vmem>>, %arg4: memref<96x32xbf16, #tpu.memory_space<vmem>>, %arg5: memref<1x96xf32, #tpu.memory_space<vmem>>, %arg6: memref<16x96xbf16, #tpu.memory_space<vmem>>, %arg7: memref<16x96xf32, #tpu.memory_space<vmem>>) attributes {dimension_semantics = [#tpu.dimension_semantics<parallel>, #tpu.dimension_semantics<parallel>, #tpu.dimension_semantics<arbitrary>], iteration_bounds = array<i64: 1, 1, 1>, scalar_prefetch = 0 : i64, scratch_operands = 1 : i64, tpu.core_type = #tpu.core_type<tc>, window_params = [{transform_indices = @transform_0, window_bounds = array<i64: 16, 32>}, {transform_indices = @transform_1, window_bounds = array<i64: 96, 32>}, {transform_indices = @transform_2, window_bounds = array<i64: 1, 96>}, {transform_indices = @transform_3, window_bounds = array<i64: 16, 96>}]} {
    %c0_i32 = arith.constant 0 : i32
    %0 = arith.cmpi eq, %arg2, %c0_i32 : i32
    %1 = arith.extui %0 : i1 to i32
    %c0_i32_0 = arith.constant 0 : i32
    %2 = arith.cmpi ne, %1, %c0_i32_0 : i32
    scf.if %2 {
      %cst_10 = arith.constant 0.000000e+00 : f32
      %12 = vector.broadcast %cst_10 : f32 to vector<16x96xf32>
      %c0_11 = arith.constant 0 : index
      %c0_12 = arith.constant 0 : index
      %13 = vector.load %arg7[%c0_11, %c0_12] : memref<16x96xf32, #tpu.memory_space<vmem>>, vector<16x96xf32>
      tpu.vector_store %arg7[%c0_11, %c0_12], %12 {strides = array<i32>} : memref<16x96xf32, #tpu.memory_space<vmem>>, vector<16x96xf32>,
    } else {
    }
    %c0 = arith.constant 0 : index
    %c0_1 = arith.constant 0 : index
    %3 = vector.load %arg7[%c0, %c0_1] : memref<16x96xf32, #tpu.memory_space<vmem>>, vector<16x96xf32>
    %c0_2 = arith.constant 0 : index
    %c0_3 = arith.constant 0 : index
    %4 = vector.load %arg3[%c0_2, %c0_3] : memref<16x32xbf16, #tpu.memory_space<vmem>>, vector<16x32xbf16>
    %c0_4 = arith.constant 0 : index
    %c0_5 = arith.constant 0 : index
    %5 = vector.load %arg4[%c0_4, %c0_5] : memref<96x32xbf16, #tpu.memory_space<vmem>>, vector<96x32xbf16>
    %cst = arith.constant dense<0.000000e+00> : vector<16x96xf32>
    %6 = tpu.matmul %4, %5, %cst {dimension_numbers = #tpu.dot_dimension_numbers<[1], [1], [0], [0], [0, 0, 1, 0], [], []>} : vector<16x32xbf16>, vector<96x32xbf16>, vector<16x96xf32> -> vector<16x96xf32>
    %7 = arith.addf %3, %6 : vector<16x96xf32>
    %c0_6 = arith.constant 0 : index
    %c0_7 = arith.constant 0 : index
    %8 = vector.load %arg7[%c0_6, %c0_7] : memref<16x96xf32, #tpu.memory_space<vmem>>, vector<16x96xf32>
    tpu.vector_store %arg7[%c0_6, %c0_7], %7 {strides = array<i32>} : memref<16x96xf32, #tpu.memory_space<vmem>>, vector<16x96xf32>,
    %c0_i32_8 = arith.constant 0 : i32
    %9 = arith.cmpi eq, %arg2, %c0_i32_8 : i32
    %10 = arith.extui %9 : i1 to i32
    %c0_i32_9 = arith.constant 0 : i32
    %11 = arith.cmpi ne, %10, %c0_i32_9 : i32
    scf.if %11 {
      %c0_10 = arith.constant 0 : index
      %c0_11 = arith.constant 0 : index
      %12 = vector.load %arg7[%c0_10, %c0_11] : memref<16x96xf32, #tpu.memory_space<vmem>>, vector<16x96xf32>
      %c0_12 = arith.constant 0 : index
      %c0_13 = arith.constant 0 : index
      %13 = vector.load %arg5[%c0_12, %c0_13] : memref<1x96xf32, #tpu.memory_space<vmem>>, vector<1x96xf32>
      %14 = vector.broadcast %13 : vector<1x96xf32> to vector<16x96xf32>
      %15 = arith.addf %12, %14 : vector<16x96xf32>
      %16 = arith.truncf %15 : vector<16x96xf32> to vector<16x96xbf16>
      %c0_14 = arith.constant 0 : index
      %c0_15 = arith.constant 0 : index
      %17 = vector.load %arg6[%c0_14, %c0_15] : memref<16x96xbf16, #tpu.memory_space<vmem>>, vector<16x96xbf16>
      tpu.vector_store %arg6[%c0_14, %c0_15], %16 {strides = array<i32>} : memref<16x96xbf16, #tpu.memory_space<vmem>>, vector<16x96xbf16>,
    } else {
    }
    return
  }
  func.func @transform_0(%arg0: i32, %arg1: i32, %arg2: i32) -> (i32, i32) {
    %c0_i32 = arith.constant 0 : i32
    return %arg0, %arg2 : i32, i32
  }
  func.func @transform_1(%arg0: i32, %arg1: i32, %arg2: i32) -> (i32, i32) {
    %c0_i32 = arith.constant 0 : i32
    return %arg1, %arg2 : i32, i32
  }
  func.func @transform_2(%arg0: i32, %arg1: i32, %arg2: i32) -> (i32, i32) {
    %c0_i32 = arith.constant 0 : i32
    %c0_i32_0 = arith.constant 0 : i32
    return %c0_i32, %arg1 : i32, i32
  }
  func.func @transform_3(%arg0: i32, %arg1: i32, %arg2: i32) -> (i32, i32) {
    %c0_i32 = arith.constant 0 : i32
    return %arg0, %arg1 : i32, i32
  }
}

module attributes {stable_mosaic.version = 11 : i64} {
  func.func @_linear_kernel(%arg0: i32, %arg1: i32, %arg2: i32, %arg3: memref<16x32xbf16, #tpu.memory_space<vmem>>, %arg4: memref<32x32xbf16, #tpu.memory_space<vmem>>, %arg5: memref<1x32xf32, #tpu.memory_space<vmem>>, %arg6: memref<16x32xf32, #tpu.memory_space<vmem>>, %arg7: memref<16x32xf32, #tpu.memory_space<vmem>>) attributes {dimension_semantics = [#tpu.dimension_semantics<parallel>, #tpu.dimension_semantics<parallel>, #tpu.dimension_semantics<arbitrary>], iteration_bounds = array<i64: 1, 1, 1>, scalar_prefetch = 0 : i64, scratch_operands = 1 : i64, tpu.core_type = #tpu.core_type<tc>, window_params = [{transform_indices = @transform_0, window_bounds = array<i64: 16, 32>}, {transform_indices = @transform_1, window_bounds = array<i64: 32, 32>}, {transform_indices = @transform_2, window_bounds = array<i64: 1, 32>}, {transform_indices = @transform_3, window_bounds = array<i64: 16, 32>}]} {
    %c0_i32 = arith.constant 0 : i32
    %0 = arith.cmpi eq, %arg2, %c0_i32 : i32
    %1 = arith.extui %0 : i1 to i32
    %c0_i32_0 = arith.constant 0 : i32
    %2 = arith.cmpi ne, %1, %c0_i32_0 : i32
    scf.if %2 {
      %cst_10 = arith.constant 0.000000e+00 : f32
      %12 = vector.broadcast %cst_10 : f32 to vector<16x32xf32>
      %c0_11 = arith.constant 0 : index
      %c0_12 = arith.constant 0 : index
      %13 = vector.load %arg7[%c0_11, %c0_12] : memref<16x32xf32, #tpu.memory_space<vmem>>, vector<16x32xf32>
      tpu.vector_store %arg7[%c0_11, %c0_12], %12 {strides = array<i32>} : memref<16x32xf32, #tpu.memory_space<vmem>>, vector<16x32xf32>,
    } else {
    }
    %c0 = arith.constant 0 : index
    %c0_1 = arith.constant 0 : index
    %3 = vector.load %arg7[%c0, %c0_1] : memref<16x32xf32, #tpu.memory_space<vmem>>, vector<16x32xf32>
    %c0_2 = arith.constant 0 : index
    %c0_3 = arith.constant 0 : index
    %4 = vector.load %arg3[%c0_2, %c0_3] : memref<16x32xbf16, #tpu.memory_space<vmem>>, vector<16x32xbf16>
    %c0_4 = arith.constant 0 : index
    %c0_5 = arith.constant 0 : index
    %5 = vector.load %arg4[%c0_4, %c0_5] : memref<32x32xbf16, #tpu.memory_space<vmem>>, vector<32x32xbf16>
    %cst = arith.constant dense<0.000000e+00> : vector<16x32xf32>
    %6 = tpu.matmul %4, %5, %cst {dimension_numbers = #tpu.dot_dimension_numbers<[1], [1], [0], [0], [0, 0, 1, 0], [], []>} : vector<16x32xbf16>, vector<32x32xbf16>, vector<16x32xf32> -> vector<16x32xf32>
    %7 = arith.addf %3, %6 : vector<16x32xf32>
    %c0_6 = arith.constant 0 : index
    %c0_7 = arith.constant 0 : index
    %8 = vector.load %arg7[%c0_6, %c0_7] : memref<16x32xf32, #tpu.memory_space<vmem>>, vector<16x32xf32>
    tpu.vector_store %arg7[%c0_6, %c0_7], %7 {strides = array<i32>} : memref<16x32xf32, #tpu.memory_space<vmem>>, vector<16x32xf32>,
    %c0_i32_8 = arith.constant 0 : i32
    %9 = arith.cmpi eq, %arg2, %c0_i32_8 : i32
    %10 = arith.extui %9 : i1 to i32
    %c0_i32_9 = arith.constant 0 : i32
    %11 = arith.cmpi ne, %10, %c0_i32_9 : i32
    scf.if %11 {
      %c0_10 = arith.constant 0 : index
      %c0_11 = arith.constant 0 : index
      %12 = vector.load %arg7[%c0_10, %c0_11] : memref<16x32xf32, #tpu.memory_space<vmem>>, vector<16x32xf32>
      %c0_12 = arith.constant 0 : index
      %c0_13 = arith.constant 0 : index
      %13 = vector.load %arg5[%c0_12, %c0_13] : memref<1x32xf32, #tpu.memory_space<vmem>>, vector<1x32xf32>
      %14 = vector.broadcast %13 : vector<1x32xf32> to vector<16x32xf32>
      %15 = arith.addf %12, %14 : vector<16x32xf32>
      %c0_14 = arith.constant 0 : index
      %c0_15 = arith.constant 0 : index
      %16 = vector.load %arg6[%c0_14, %c0_15] : memref<16x32xf32, #tpu.memory_space<vmem>>, vector<16x32xf32>
      tpu.vector_store %arg6[%c0_14, %c0_15], %15 {strides = array<i32>} : memref<16x32xf32, #tpu.memory_space<vmem>>, vector<16x32xf32>,
    } else {
    }
    return
  }
  func.func @transform_0(%arg0: i32, %arg1: i32, %arg2: i32) -> (i32, i32) {
    %c0_i32 = arith.constant 0 : i32
    return %arg0, %arg2 : i32, i32
  }
  func.func @transform_1(%arg0: i32, %arg1: i32, %arg2: i32) -> (i32, i32) {
    %c0_i32 = arith.constant 0 : i32
    return %arg1, %arg2 : i32, i32
  }
  func.func @transform_2(%arg0: i32, %arg1: i32, %arg2: i32) -> (i32, i32) {
    %c0_i32 = arith.constant 0 : i32
    %c0_i32_0 = arith.constant 0 : i32
    return %c0_i32, %arg1 : i32, i32
  }
  func.func @transform_3(%arg0: i32, %arg1: i32, %arg2: i32) -> (i32, i32) {
    %c0_i32 = arith.constant 0 : i32
    return %arg0, %arg1 : i32, i32
  }
}

module attributes {stable_mosaic.version = 11 : i64} {
  func.func @kernel(%arg0: i32, %arg1: i32, %arg2: memref<1x8x32xbf16, #tpu.memory_space<vmem>>, %arg3: memref<1x8x32xbf16, #tpu.memory_space<vmem>>, %arg4: memref<1x8x32xbf16, #tpu.memory_space<vmem>>, %arg5: memref<8x4xf32, #tpu.memory_space<vmem>>, %arg6: memref<8x4xf32, #tpu.memory_space<vmem>>, %arg7: memref<8x4xf32, #tpu.memory_space<vmem>>, %arg8: memref<8x4xf32, #tpu.memory_space<vmem>>, %arg9: memref<1x8x32xbf16, #tpu.memory_space<vmem>>, %arg10: memref<1x8x8xf32, #tpu.memory_space<vmem>>) attributes {dimension_semantics = [#tpu.dimension_semantics<parallel>, #tpu.dimension_semantics<parallel>], iteration_bounds = array<i64: 2, 1>, scalar_prefetch = 0 : i64, scratch_operands = 0 : i64, tpu.core_type = #tpu.core_type<tc>, window_params = [{transform_indices = @transform_0, window_bounds = array<i64: 1, 8, 32>}, {transform_indices = @transform_1, window_bounds = array<i64: 1, 8, 32>}, {transform_indices = @transform_2, window_bounds = array<i64: 1, 8, 32>}, {transform_indices = @transform_3, window_bounds = array<i64: 8, 4>}, {transform_indices = @transform_4, window_bounds = array<i64: 8, 4>}, {pipeline_mode = #tpu.pipeline_mode<synchronous>, transform_indices = @transform_5, window_bounds = array<i64: 8, 4>}, {pipeline_mode = #tpu.pipeline_mode<synchronous>, transform_indices = @transform_6, window_bounds = array<i64: 8, 4>}, {transform_indices = @transform_7, window_bounds = array<i64: 1, 8, 32>}, {transform_indices = @transform_8, window_bounds = array<i64: 1, 8, 8>}]} {
    %c0 = arith.constant 0 : index
    %c0_0 = arith.constant 0 : index
    %c0_1 = arith.constant 0 : index
    %0 = vector.load %arg2[%c0, %c0_0, %c0_1] : memref<1x8x32xbf16, #tpu.memory_space<vmem>>, vector<1x8x32xbf16>
    %1 = vector.shape_cast %0 : vector<1x8x32xbf16> to vector<8x32xbf16>
    %2 = vector.shape_cast %1 : vector<8x32xbf16> to vector<8x4x8xbf16>
    %3 = tpu.transpose %2, [1, 0, 2] : vector<8x4x8xbf16> -> vector<4x8x8xbf16>
    %4 = arith.extf %3 : vector<4x8x8xbf16> to vector<4x8x8xf32>
    %c0_2 = arith.constant 0 : index
    %c0_3 = arith.constant 0 : index
    %c0_4 = arith.constant 0 : index
    %5 = vector.load %arg3[%c0_2, %c0_3, %c0_4] : memref<1x8x32xbf16, #tpu.memory_space<vmem>>, vector<1x8x32xbf16>
    %6 = vector.shape_cast %5 : vector<1x8x32xbf16> to vector<8x32xbf16>
    %7 = vector.shape_cast %6 : vector<8x32xbf16> to vector<8x4x8xbf16>
    %8 = tpu.transpose %7, [1, 0, 2] : vector<8x4x8xbf16> -> vector<4x8x8xbf16>
    %9 = arith.extf %8 : vector<4x8x8xbf16> to vector<4x8x8xf32>
    %c0_5 = arith.constant 0 : index
    %c0_6 = arith.constant 0 : index
    %10 = vector.load %arg5[%c0_5, %c0_6] : memref<8x4xf32, #tpu.memory_space<vmem>>, vector<8x4xf32>
    %11 = vector.shape_cast %10 : vector<8x4xf32> to vector<1x8x4xf32>
    %c0_7 = arith.constant 0 : index
    %c0_8 = arith.constant 0 : index
    %12 = vector.load %arg6[%c0_7, %c0_8] : memref<8x4xf32, #tpu.memory_space<vmem>>, vector<8x4xf32>
    %13 = vector.shape_cast %12 : vector<8x4xf32> to vector<1x8x4xf32>
    %c0_9 = arith.constant 0 : index
    %c0_10 = arith.constant 0 : index
    %14 = vector.load %arg7[%c0_9, %c0_10] : memref<8x4xf32, #tpu.memory_space<vmem>>, vector<8x4xf32>
    %15 = vector.shape_cast %14 : vector<8x4xf32> to vector<1x8x4xf32>
    %c0_11 = arith.constant 0 : index
    %c0_12 = arith.constant 0 : index
    %16 = vector.load %arg8[%c0_11, %c0_12] : memref<8x4xf32, #tpu.memory_space<vmem>>, vector<8x4xf32>
    %17 = vector.shape_cast %16 : vector<8x4xf32> to vector<1x8x4xf32>
    %18 = vector.extract_strided_slice %4 {offsets = [0, 0, 0], sizes = [4, 8, 4], strides = [1, 1, 1]} : vector<4x8x8xf32> to vector<4x8x4xf32>
    %19 = vector.extract_strided_slice %4 {offsets = [0, 0, 4], sizes = [4, 8, 4], strides = [1, 1, 1]} : vector<4x8x8xf32> to vector<4x8x4xf32>
    %20 = vector.extract_strided_slice %9 {offsets = [0, 0, 0], sizes = [4, 8, 4], strides = [1, 1, 1]} : vector<4x8x8xf32> to vector<4x8x4xf32>
    %21 = vector.extract_strided_slice %9 {offsets = [0, 0, 4], sizes = [4, 8, 4], strides = [1, 1, 1]} : vector<4x8x8xf32> to vector<4x8x4xf32>
    %22 = vector.broadcast %11 : vector<1x8x4xf32> to vector<4x8x4xf32>
    %23 = arith.mulf %18, %22 : vector<4x8x4xf32>
    %24 = vector.broadcast %13 : vector<1x8x4xf32> to vector<4x8x4xf32>
    %25 = arith.mulf %19, %24 : vector<4x8x4xf32>
    %26 = arith.subf %23, %25 : vector<4x8x4xf32>
    %27 = vector.broadcast %13 : vector<1x8x4xf32> to vector<4x8x4xf32>
    %28 = arith.mulf %18, %27 : vector<4x8x4xf32>
    %29 = vector.broadcast %11 : vector<1x8x4xf32> to vector<4x8x4xf32>
    %30 = arith.mulf %19, %29 : vector<4x8x4xf32>
    %31 = arith.addf %28, %30 : vector<4x8x4xf32>
    %32 = tpu.concatenate %26, %31 in 2 : vector<4x8x4xf32>, vector<4x8x4xf32> -> vector<4x8x8xf32>
    %33 = vector.broadcast %15 : vector<1x8x4xf32> to vector<4x8x4xf32>
    %34 = arith.mulf %20, %33 : vector<4x8x4xf32>
    %35 = vector.broadcast %17 : vector<1x8x4xf32> to vector<4x8x4xf32>
    %36 = arith.mulf %21, %35 : vector<4x8x4xf32>
    %37 = arith.subf %34, %36 : vector<4x8x4xf32>
    %38 = vector.broadcast %17 : vector<1x8x4xf32> to vector<4x8x4xf32>
    %39 = arith.mulf %20, %38 : vector<4x8x4xf32>
    %40 = vector.broadcast %15 : vector<1x8x4xf32> to vector<4x8x4xf32>
    %41 = arith.mulf %21, %40 : vector<4x8x4xf32>
    %42 = arith.addf %39, %41 : vector<4x8x4xf32>
    %43 = tpu.concatenate %37, %42 in 2 : vector<4x8x4xf32>, vector<4x8x4xf32> -> vector<4x8x8xf32>
    %44 = arith.truncf %32 : vector<4x8x8xf32> to vector<4x8x8xbf16>
    %45 = arith.truncf %43 : vector<4x8x8xf32> to vector<4x8x8xbf16>
    "tpu.trace_start"() <{level = 10 : i32, message = "hqd,hkd->hqk"}> : () -> ()
    %cst = arith.constant dense<0.000000e+00> : vector<4x8x8xf32>
    %46 = tpu.matmul %44, %45, %cst {dimension_numbers = #tpu.dot_dimension_numbers<[2], [2], [1], [1], [0, 0, 0, 1, 1, 1], [0], [0]>} : vector<4x8x8xbf16>, vector<4x8x8xbf16>, vector<4x8x8xf32> -> vector<4x8x8xf32>
    "tpu.trace_stop"() : () -> ()
    %cst_13 = arith.constant dense<0xFF800000> : vector<4x8xf32>
    %47 = vector.multi_reduction <maximumf>, %46, %cst_13 [2] : vector<4x8x8xf32> to vector<4x8xf32>
    %48 = vector.shape_cast %47 : vector<4x8xf32> to vector<4x8x1xf32>
    %49 = vector.broadcast %48 : vector<4x8x1xf32> to vector<4x8x8xf32>
    %50 = arith.subf %46, %49 : vector<4x8x8xf32>
    %51 = math.exp %50 : vector<4x8x8xf32>
    %cst_14 = arith.constant dense<0.000000e+00> : vector<4x8xf32>
    %52 = vector.multi_reduction <add>, %51, %cst_14 [2] : vector<4x8x8xf32> to vector<4x8xf32>
    %53 = vector.shape_cast %52 : vector<4x8xf32> to vector<4x8x1xf32>
    %54 = vector.broadcast %53 : vector<4x8x1xf32> to vector<4x8x8xf32>
    %55 = arith.divf %51, %54 : vector<4x8x8xf32>
    %cst_15 = arith.constant dense<0.000000e+00> : vector<8x8xf32>
    %56 = vector.multi_reduction <add>, %55, %cst_15 [0] : vector<4x8x8xf32> to vector<8x8xf32>
    %cst_16 = arith.constant 2.500000e-01 : f32
    %57 = vector.broadcast %cst_16 : f32 to vector<8x8xf32>
    %58 = arith.mulf %56, %57 : vector<8x8xf32>
    %c0_17 = arith.constant 0 : index
    %c0_18 = arith.constant 0 : index
    %c0_19 = arith.constant 0 : index
    %59 = vector.load %arg10[%c0_17, %c0_18, %c0_19] : memref<1x8x8xf32, #tpu.memory_space<vmem>>, vector<1x8x8xf32>
    %60 = vector.shape_cast %59 : vector<1x8x8xf32> to vector<8x8xf32>
    %61 = vector.shape_cast %58 : vector<8x8xf32> to vector<1x8x8xf32>
    tpu.vector_store %arg10[%c0_17, %c0_18, %c0_19], %61 {strides = array<i32>} : memref<1x8x8xf32, #tpu.memory_space<vmem>>, vector<1x8x8xf32>,
    %c0_20 = arith.constant 0 : index
    %c0_21 = arith.constant 0 : index
    %c0_22 = arith.constant 0 : index
    %62 = vector.load %arg4[%c0_20, %c0_21, %c0_22] : memref<1x8x32xbf16, #tpu.memory_space<vmem>>, vector<1x8x32xbf16>
    %63 = vector.shape_cast %62 : vector<1x8x32xbf16> to vector<8x32xbf16>
    %64 = vector.shape_cast %63 : vector<8x32xbf16> to vector<8x4x8xbf16>
    %65 = tpu.transpose %64, [1, 0, 2] : vector<8x4x8xbf16> -> vector<4x8x8xbf16>
    %66 = arith.truncf %55 : vector<4x8x8xf32> to vector<4x8x8xbf16>
    "tpu.trace_start"() <{level = 10 : i32, message = "hqk,hkd->hqd"}> : () -> ()
    %cst_23 = arith.constant dense<0.000000e+00> : vector<4x8x8xf32>
    %67 = tpu.matmul %66, %65, %cst_23 {dimension_numbers = #tpu.dot_dimension_numbers<[2], [1], [1], [2], [0, 0, 0, 1, 1, 2], [0], [0]>} : vector<4x8x8xbf16>, vector<4x8x8xbf16>, vector<4x8x8xf32> -> vector<4x8x8xf32>
    "tpu.trace_stop"() : () -> ()
    %68 = tpu.transpose %67, [1, 0, 2] : vector<4x8x8xf32> -> vector<8x4x8xf32>
    %69 = vector.shape_cast %68 : vector<8x4x8xf32> to vector<8x32xf32>
    %70 = arith.truncf %69 : vector<8x32xf32> to vector<8x32xbf16>
    %c0_24 = arith.constant 0 : index
    %c0_25 = arith.constant 0 : index
    %c0_26 = arith.constant 0 : index
    %71 = vector.load %arg9[%c0_24, %c0_25, %c0_26] : memref<1x8x32xbf16, #tpu.memory_space<vmem>>, vector<1x8x32xbf16>
    %72 = vector.shape_cast %71 : vector<1x8x32xbf16> to vector<8x32xbf16>
    %73 = vector.shape_cast %70 : vector<8x32xbf16> to vector<1x8x32xbf16>
    tpu.vector_store %arg9[%c0_24, %c0_25, %c0_26], %73 {strides = array<i32>} : memref<1x8x32xbf16, #tpu.memory_space<vmem>>, vector<1x8x32xbf16>,
    return
  }
  func.func @transform_0(%arg0: i32, %arg1: i32) -> (i32, i32, i32) {
    %c0_i32 = arith.constant 0 : i32
    %c0_i32_0 = arith.constant 0 : i32
    return %arg0, %arg1, %c0_i32 : i32, i32, i32
  }
  func.func @transform_1(%arg0: i32, %arg1: i32) -> (i32, i32, i32) {
    %c0_i32 = arith.constant 0 : i32
    %c0_i32_0 = arith.constant 0 : i32
    %c0_i32_1 = arith.constant 0 : i32
    return %arg0, %c0_i32, %c0_i32_0 : i32, i32, i32
  }
  func.func @transform_2(%arg0: i32, %arg1: i32) -> (i32, i32, i32) {
    %c0_i32 = arith.constant 0 : i32
    %c0_i32_0 = arith.constant 0 : i32
    %c0_i32_1 = arith.constant 0 : i32
    return %arg0, %c0_i32, %c0_i32_0 : i32, i32, i32
  }
  func.func @transform_3(%arg0: i32, %arg1: i32) -> (i32, i32) {
    %c0_i32 = arith.constant 0 : i32
    %c0_i32_0 = arith.constant 0 : i32
    return %arg1, %c0_i32 : i32, i32
  }
  func.func @transform_4(%arg0: i32, %arg1: i32) -> (i32, i32) {
    %c0_i32 = arith.constant 0 : i32
    %c0_i32_0 = arith.constant 0 : i32
    return %arg1, %c0_i32 : i32, i32
  }
  func.func @transform_5(%arg0: i32, %arg1: i32) -> (i32, i32) {
    %c0_i32 = arith.constant 0 : i32
    %c0_i32_0 = arith.constant 0 : i32
    %c0_i32_1 = arith.constant 0 : i32
    return %c0_i32, %c0_i32_0 : i32, i32
  }
  func.func @transform_6(%arg0: i32, %arg1: i32) -> (i32, i32) {
    %c0_i32 = arith.constant 0 : i32
    %c0_i32_0 = arith.constant 0 : i32
    %c0_i32_1 = arith.constant 0 : i32
    return %c0_i32, %c0_i32_0 : i32, i32
  }
  func.func @transform_7(%arg0: i32, %arg1: i32) -> (i32, i32, i32) {
    %c0_i32 = arith.constant 0 : i32
    %c0_i32_0 = arith.constant 0 : i32
    return %arg0, %arg1, %c0_i32 : i32, i32, i32
  }
  func.func @transform_8(%arg0: i32, %arg1: i32) -> (i32, i32, i32) {
    %c0_i32 = arith.constant 0 : i32
    %c0_i32_0 = arith.constant 0 : i32
    return %arg0, %arg1, %c0_i32 : i32, i32, i32
  }
}

</mosaic_0001>

<llo_original>
// kernel: multihead_attention_forward.5
$region0: #{multihead_attention_forward.5}
  #allocation0 [shape = 'u32[]', space=smem, size = 0x4, offset = 0x4, fixed_abs, tag = 'smem constant byte address 0x4 - core index']
  #allocation1 [shape = 'u32[144,128]{1,0:T(1,128)}', space=vmem, size = 0x12000, scoped, tag = 'internal scratch']
  #allocation2 [shape = 'f32[16,32]{1,0:T(8,128)}', space=vmem, size = 0x2000, scoped, tag = 'scratch operand']
  %s0 = inlined_call_operand.vmem [shape: bf16[16,32], index: 0, kind: input, shape index: {}]
  %s1 = inlined_call_operand.vmem [shape: bf16[32,32], index: 1, kind: input, shape index: {}]
  %s2 = inlined_call_operand.vmem [shape: f32[1,32], index: 2, kind: input, shape index: {}]
  %s3 = inlined_call_operand.hbm [shape: f32[16,32], index: 3, kind: output, shape index: {}]
  %s4 = sld [smem:[#allocation0]]
  $region30: #{multihead_attention_forward.5} parent=0
    _
  %s6 = ssub.s32 1, %s4
  %s7 = scalar_select 0, %s6, %s4
  $region1: #{multihead_attention_forward.5} parent=0
    #allocation3 [shape = 'u8[8192]{0}', space=vmem, size = 0x2000, scoped, tag = 'output window, operand 0, single buffered']
    #allocation4 [shape = 's32[1]{0}', space=sflag, size = 0x4, scoped, tag = 'scoped memory for multihead_attention_forward.5']
    %8 = vsyncpa [#allocation4], 0
    // Predicated region
    $region2: #{multihead_attention_forward.5} parent=1 // pred_check
      _
    $region3: #{multihead_attention_forward.5} parent=1 // pred_check_branch
      %10 = sbr.rel (0) target = $region5
    $region4: #{multihead_attention_forward.5} parent=1 // pred_region
      _
    $region5: #{multihead_attention_forward.5} parent=1 // pred_fallthru
      _
    // Predicated region
    $region6: #{multihead_attention_forward.5} parent=1 // pred_check
      _
    $region7: #{multihead_attention_forward.5} parent=1 // pred_check_branch
      %12 = sbr.rel (0) target = $region9
    $region8: #{multihead_attention_forward.5} parent=1 // pred_region
      _
    $region9: #{multihead_attention_forward.5} parent=1 // pred_fallthru
      _
    // Predicated region
    $region10: #{multihead_attention_forward.5} parent=1 // pred_check
      _
    $region11: #{multihead_attention_forward.5} parent=1 // pred_check_branch
      %14 = sbr.rel (0) target = $region13
    $region12: #{multihead_attention_forward.5} parent=1 // pred_region
      _
    $region13: #{multihead_attention_forward.5} parent=1 // pred_fallthru
      _
    %p16 = scmp.eq.s32.totalorder 0, 0
    // Predicated region
    $region14: #{multihead_attention_forward.5} parent=1 // pred_check
      %p17 = pneg %p16
    $region15: #{multihead_attention_forward.5} parent=1 // pred_check_branch
      %19 = sbr.rel (%p17) target = $region17
    $region16: #{multihead_attention_forward.5} parent=1 // pred_region
      %vm20 = vcmask 261120
      %21 = vst.msk [vmem:[#allocation2] sm:$0xff] %vm20, 0.0
      %22 = vst.msk [vmem:[#allocation2 + $0x8] sm:$0xff] %vm20, 0.0
    $region17: #{multihead_attention_forward.5} parent=1 // pred_fallthru
      _
    %v23 = vld [vmem:[#allocation2] sm:$0xff]
    %v24 = vld [vmem:[#allocation2 + $0x8] sm:$0xff]
    %v25 = vld [vmem:[%s0] sm:$0xf]
    %v26 = vld [vmem:[%s0 + $0x4] sm:$0xf]
    %v27 = vld [vmem:[%s1] sm:$0xf]
    %v28 = vld [vmem:[%s1 + $0x4] sm:$0xf]
    %v29 = vld [vmem:[%s1 + $0x8] sm:$0xf]
    %v30 = vld [vmem:[%s1 + $0xc] sm:$0xf]
    %v33 = vunpack.c.l.b16 %v25
    %v34 = vunpack.c.l.b16 %v26
    %v35 = vpack.c.b16 %v34, %v33
    %v40 = vunpack.c.l.b16 %v27
    %v41 = vunpack.c.l.b16 %v28
    %v42 = vunpack.c.l.b16 %v29
    %v43 = vunpack.c.l.b16 %v30
    %v44 = vpack.c.b16 %v41, %v40
    %v45 = vpack.c.b16 %v43, %v42
    %vm46 = vcmask 261120
    %v48 = vsel %vm46, %v35, 0
    %v51 = vsel %vm46, %v44, 0
    %v54 = vsel %vm46, %v45, 0
    %56 = vmatprep.subr.bf16.mxu0 0
    %57 = vmatpush1.bf16.xpose.msra.mxu0 %v51
    %58 = vmatprep.subr.bf16.mxu0 0
    %59 = vmatpush1.bf16.xpose.msra.mxu0 %v54
    %60 = vmatprep.subr.bf16.mxu0 0
    %61 = vmatpush1.bf16.xpose.msra.mxu0 0
    %62 = vmatprep.subr.bf16.mxu0 0
    %63 = vmatpush1.bf16.xpose.msra.mxu0 0
    %64 = vmatprep.subr.bf16.mxu0 0
    %65 = vmatpush1.bf16.xpose.msra.mxu0 0
    %66 = vmatprep.subr.bf16.mxu0 0
    %67 = vmatpush1.bf16.xpose.msra.mxu0 0
    %68 = vmatprep.subr.bf16.mxu0 0
    %69 = vmatpush1.bf16.xpose.msra.mxu0 0
    %70 = vmatprep.subr.bf16.mxu0 0
    %71 = vmatpush1.bf16.xpose.msra.mxu0 0
    %72 = vmatprep.subr.bf16.mxu0 0
    %73 = vmatpush1.bf16.xpose.msra.mxu0 0
    %74 = vmatprep.subr.bf16.mxu0 0
    %75 = vmatpush1.bf16.xpose.msra.mxu0 0
    %76 = vmatprep.subr.bf16.mxu0 0
    %77 = vmatpush1.bf16.xpose.msra.mxu0 0
    %78 = vmatprep.subr.bf16.mxu0 0
    %79 = vmatpush1.bf16.xpose.msra.mxu0 0
    %80 = vmatprep.subr.bf16.mxu0 0
    %81 = vmatpush1.bf16.xpose.msra.mxu0 0
    %82 = vmatprep.subr.bf16.mxu0 0
    %83 = vmatpush1.bf16.xpose.msra.mxu0 0
    %84 = vmatprep.subr.bf16.mxu0 0
    %85 = vmatpush1.bf16.xpose.msra.mxu0 0
    %86 = vmatprep.subr.bf16.mxu0 0
    %87 = vmatpush1.bf16.xpose.msra.mxu0 0
    %88 = vmatprep.mubr.bf16.mxu0 0
    %89 = vmatmul.mubr.bf16.gmra.mrb[0].mxu0 %v48
    %v90 = vpop.f32.mrb[0].mxu0
    %v91 = vadd.f32 0.0, %v90
    %v92 = vpop.f32.mrb[0].mxu0
    %v93 = vpop.f32.mrb[0].mxu0
    %v94 = vadd.f32 0.0, %v93
    %v95 = vpop.f32.mrb[0].mxu0
    %96 = vdwg.mxu0
    %v97 = vadd.f32 %v23, %v91
    %v98 = vadd.f32 %v24, %v94
    %99 = vst.msk [vmem:[#allocation2] sm:$0xff] %vm46, %v97
    %100 = vst.msk [vmem:[#allocation2 + $0x8] sm:$0xff] %vm46, %v98
    // Predicated region
    $region18: #{multihead_attention_forward.5} parent=1 // pred_check
      %p101 = pneg %p16
    $region19: #{multihead_attention_forward.5} parent=1 // pred_check_branch
      %103 = sbr.rel (%p101) target = $region21
    $region20: #{multihead_attention_forward.5} parent=1 // pred_region
      %v104 = vld [vmem:[#allocation2] sm:$0xff]
      %v105 = vld [vmem:[#allocation2 + $0x8] sm:$0xff]
      %v106 = vld [vmem:[%s2] sm:$0x1]
      %v108 = vlaneseq
      %v109 = vshrl.u32 %v108, 7
      %v110 = vsub.s32 0, %v109
      %v111 = vrot.slane %v106, %v110
      %v113 = vadd.f32 %v104, %v111
      %v114 = vadd.f32 %v105, %v111
      %115 = vst.msk [vmem:[#allocation3] sm:$0xff] %vm46, %v113
      %116 = vst.msk [vmem:[#allocation3 + $0x8] sm:$0xff] %vm46, %v114
    $region21: #{multihead_attention_forward.5} parent=1 // pred_fallthru
      _
    // Predicated region
    $region22: #{multihead_attention_forward.5} parent=1 // pred_check
      _
    $region23: #{multihead_attention_forward.5} parent=1 // pred_check_branch
      %118 = sbr.rel (0) target = $region25
    $region24: #{multihead_attention_forward.5} parent=1 // pred_region
      %s120 = ssub.s32 256, 256
      %121 = vsyncadd [#allocation4], %s120
      %s122 = sshll.u32 [#allocation3], 4
      %s123 = int_to_ptr.vmem [resolvable:$true] %s122
      %128 = dma.vmem_to_hbm [thread:$0]  %s123, 256, %s3, [#allocation4], 128, 128, 8
    $region25: #{multihead_attention_forward.5} parent=1 // pred_fallthru
      _
    // Predicated region
    $region26: #{multihead_attention_forward.5} parent=1 // pred_check
      _
    $region27: #{multihead_attention_forward.5} parent=1 // pred_check_branch
      %130 = sbr.rel (0) target = $region29
    $region28: #{multihead_attention_forward.5} parent=1 // pred_region
      %131 = dma.done [#allocation4], 256
    $region29: #{multihead_attention_forward.5} parent=1 // pred_fallthru
      _
    %132 = vsyncpa [#allocation4], 1

// kernel: multihead_attention_forward.3
$region0: #{multihead_attention_forward.3}
  #allocation0 [shape = 'u32[]', space=smem, size = 0x4, offset = 0x4, fixed_abs, tag = 'smem constant byte address 0x4 - core index']
  #allocation1 [shape = 'u32[144,128]{1,0:T(1,128)}', space=vmem, size = 0x12000, scoped, tag = 'internal scratch']
  #allocation2 [shape = 'f32[16,96]{1,0:T(8,128)}', space=vmem, size = 0x2000, scoped, tag = 'scratch operand']
  %s0 = inlined_call_operand.vmem [shape: bf16[16,32], index: 0, kind: input, shape index: {}]
  %s1 = inlined_call_operand.vmem [shape: bf16[96,32], index: 1, kind: input, shape index: {}]
  %s2 = inlined_call_operand.vmem [shape: f32[1,96], index: 2, kind: input, shape index: {}]
  %s3 = inlined_call_operand.vmem [shape: bf16[16,96], index: 3, kind: output, shape index: {}]
  %s4 = sld [smem:[#allocation0]]
  $region30: #{multihead_attention_forward.3} parent=0
    _
  %s6 = ssub.s32 1, %s4
  %s7 = scalar_select 0, %s6, %s4
  // Predicated region
  $region2: #{multihead_attention_forward.3} parent=0 // pred_check
    _
  $region3: #{multihead_attention_forward.3} parent=0 // pred_check_branch
    %9 = sbr.rel (0) target = $region5
  $region4: #{multihead_attention_forward.3} parent=0 // pred_region
    _
  $region5: #{multihead_attention_forward.3} parent=0 // pred_fallthru
    _
  // Predicated region
  $region6: #{multihead_attention_forward.3} parent=0 // pred_check
    _
  $region7: #{multihead_attention_forward.3} parent=0 // pred_check_branch
    %11 = sbr.rel (0) target = $region9
  $region8: #{multihead_attention_forward.3} parent=0 // pred_region
    _
  $region9: #{multihead_attention_forward.3} parent=0 // pred_fallthru
    _
  // Predicated region
  $region10: #{multihead_attention_forward.3} parent=0 // pred_check
    _
  $region11: #{multihead_attention_forward.3} parent=0 // pred_check_branch
    %13 = sbr.rel (0) target = $region13
  $region12: #{multihead_attention_forward.3} parent=0 // pred_region
    _
  $region13: #{multihead_attention_forward.3} parent=0 // pred_fallthru
    _
  %p15 = scmp.eq.s32.totalorder 0, 0
  // Predicated region
  $region14: #{multihead_attention_forward.3} parent=0 // pred_check
    %p16 = pneg %p15
  $region15: #{multihead_attention_forward.3} parent=0 // pred_check_branch
    %18 = sbr.rel (%p16) target = $region17
  $region16: #{multihead_attention_forward.3} parent=0 // pred_region
    %vm19 = vcmask 785408
    %20 = vst.msk [vmem:[#allocation2] sm:$0xff] %vm19, 0.0
    %21 = vst.msk [vmem:[#allocation2 + $0x8] sm:$0xff] %vm19, 0.0
  $region17: #{multihead_attention_forward.3} parent=0 // pred_fallthru
    _
  %v22 = vld [vmem:[#allocation2] sm:$0xff]
  %v23 = vld [vmem:[#allocation2 + $0x8] sm:$0xff]
  %v24 = vld [vmem:[%s0] sm:$0xf]
  %v25 = vld [vmem:[%s0 + $0x4] sm:$0xf]
  %v26 = vld [vmem:[%s1] sm:$0xf]
  %v27 = vld [vmem:[%s1 + $0x4] sm:$0xf]
  %v28 = vld [vmem:[%s1 + $0x8] sm:$0xf]
  %v29 = vld [vmem:[%s1 + $0xc] sm:$0xf]
  %v30 = vld [vmem:[%s1 + $0x10] sm:$0xf]
  %v31 = vld [vmem:[%s1 + $0x14] sm:$0xf]
  %v32 = vld [vmem:[%s1 + $0x18] sm:$0xf]
  %v33 = vld [vmem:[%s1 + $0x1c] sm:$0xf]
  %v34 = vld [vmem:[%s1 + $0x20] sm:$0xf]
  %v35 = vld [vmem:[%s1 + $0x24] sm:$0xf]
  %v36 = vld [vmem:[%s1 + $0x28] sm:$0xf]
  %v37 = vld [vmem:[%s1 + $0x2c] sm:$0xf]
  %v40 = vunpack.c.l.b16 %v24
  %v41 = vunpack.c.l.b16 %v25
  %v42 = vpack.c.b16 %v41, %v40
  %v55 = vunpack.c.l.b16 %v26
  %v56 = vunpack.c.l.b16 %v27
  %v57 = vunpack.c.l.b16 %v28
  %v58 = vunpack.c.l.b16 %v29
  %v59 = vunpack.c.l.b16 %v30
  %v60 = vunpack.c.l.b16 %v31
  %v61 = vunpack.c.l.b16 %v32
  %v62 = vunpack.c.l.b16 %v33
  %v63 = vunpack.c.l.b16 %v34
  %v64 = vunpack.c.l.b16 %v35
  %v65 = vunpack.c.l.b16 %v36
  %v66 = vunpack.c.l.b16 %v37
  %v67 = vpack.c.b16 %v56, %v55
  %v68 = vpack.c.b16 %v58, %v57
  %v69 = vpack.c.b16 %v60, %v59
  %v70 = vpack.c.b16 %v62, %v61
  %v71 = vpack.c.b16 %v64, %v63
  %v72 = vpack.c.b16 %v66, %v65
  %vm73 = vcmask 261120
  %v75 = vsel %vm73, %v42, 0
  %v78 = vsel %vm73, %v67, 0
  %v81 = vsel %vm73, %v68, 0
  %v84 = vsel %vm73, %v69, 0
  %v87 = vsel %vm73, %v70, 0
  %v90 = vsel %vm73, %v71, 0
  %v93 = vsel %vm73, %v72, 0
  %95 = vmatprep.subr.bf16.mxu0 0
  %96 = vmatpush1.bf16.xpose.msra.mxu0 %v78
  %97 = vmatprep.subr.bf16.mxu0 0
  %98 = vmatpush1.bf16.xpose.msra.mxu0 %v81
  %99 = vmatprep.subr.bf16.mxu0 0
  %100 = vmatpush1.bf16.xpose.msra.mxu0 %v84
  %101 = vmatprep.subr.bf16.mxu0 0
  %102 = vmatpush1.bf16.xpose.msra.mxu0 %v87
  %103 = vmatprep.subr.bf16.mxu0 0
  %104 = vmatpush1.bf16.xpose.msra.mxu0 %v90
  %105 = vmatprep.subr.bf16.mxu0 0
  %106 = vmatpush1.bf16.xpose.msra.mxu0 %v93
  %107 = vmatprep.subr.bf16.mxu0 0
  %108 = vmatpush1.bf16.xpose.msra.mxu0 0
  %109 = vmatprep.subr.bf16.mxu0 0
  %110 = vmatpush1.bf16.xpose.msra.mxu0 0
  %111 = vmatprep.subr.bf16.mxu0 0
  %112 = vmatpush1.bf16.xpose.msra.mxu0 0
  %113 = vmatprep.subr.bf16.mxu0 0
  %114 = vmatpush1.bf16.xpose.msra.mxu0 0
  %115 = vmatprep.subr.bf16.mxu0 0
  %116 = vmatpush1.bf16.xpose.msra.mxu0 0
  %117 = vmatprep.subr.bf16.mxu0 0
  %118 = vmatpush1.bf16.xpose.msra.mxu0 0
  %119 = vmatprep.subr.bf16.mxu0 0
  %120 = vmatpush1.bf16.xpose.msra.mxu0 0
  %121 = vmatprep.subr.bf16.mxu0 0
  %122 = vmatpush1.bf16.xpose.msra.mxu0 0
  %123 = vmatprep.subr.bf16.mxu0 0
  %124 = vmatpush1.bf16.xpose.msra.mxu0 0
  %125 = vmatprep.subr.bf16.mxu0 0
  %126 = vmatpush1.bf16.xpose.msra.mxu0 0
  %127 = vmatprep.mubr.bf16.mxu0 0
  %128 = vmatmul.mubr.bf16.gmra.mrb[0].mxu0 %v75
  %v129 = vpop.f32.mrb[0].mxu0
  %v130 = vadd.f32 0.0, %v129
  %v131 = vpop.f32.mrb[0].mxu0
  %v132 = vpop.f32.mrb[0].mxu0
  %v133 = vadd.f32 0.0, %v132
  %v134 = vpop.f32.mrb[0].mxu0
  %135 = vdwg.mxu0
  %v136 = vadd.f32 %v22, %v130
  %v137 = vadd.f32 %v23, %v133
  %vm138 = vcmask 785408
  %139 = vst.msk [vmem:[#allocation2] sm:$0xff] %vm138, %v136
  %140 = vst.msk [vmem:[#allocation2 + $0x8] sm:$0xff] %vm138, %v137
  // Predicated region
  $region18: #{multihead_attention_forward.3} parent=0 // pred_check
    %p141 = pneg %p15
  $region19: #{multihead_attention_forward.3} parent=0 // pred_check_branch
    %143 = sbr.rel (%p141) target = $region21
  $region20: #{multihead_attention_forward.3} parent=0 // pred_region
    %v144 = vld [vmem:[#allocation2] sm:$0xff]
    %v145 = vld [vmem:[#allocation2 + $0x8] sm:$0xff]
    %v146 = vld [vmem:[%s2] sm:$0x1]
    %v148 = vlaneseq
    %v149 = vshrl.u32 %v148, 7
    %v150 = vsub.s32 0, %v149
    %v151 = vrot.slane %v146, %v150
    %v153 = vadd.f32 %v144, %v151
    %v154 = vadd.f32 %v145, %v151
    %v155 = vpack.c.bf16 %v154, %v153
    %v157 = vunpack.c.l.b16 %v155
    %v158 = vunpack.c.h.b16 %v155
    %v159 = vpack.c.b16 %v157, %v157
    %v160 = vpack.c.b16 %v158, %v158
    %vm163 = vcmask 781312
    %164 = vst.msk [vmem:[%s3] sm:$0xf] %vm163, %v159
    %165 = vst.msk [vmem:[%s3 + $0x4] sm:$0xf] %vm163, %v160
  $region21: #{multihead_attention_forward.3} parent=0 // pred_fallthru
    _
  // Predicated region
  $region22: #{multihead_attention_forward.3} parent=0 // pred_check
    _
  $region23: #{multihead_attention_forward.3} parent=0 // pred_check_branch
    %167 = sbr.rel (0) target = $region25
  $region24: #{multihead_attention_forward.3} parent=0 // pred_region
    _
  $region25: #{multihead_attention_forward.3} parent=0 // pred_fallthru
    _
  // Predicated region
  $region26: #{multihead_attention_forward.3} parent=0 // pred_check
    _
  $region27: #{multihead_attention_forward.3} parent=0 // pred_check_branch
    %169 = sbr.rel (0) target = $region29
  $region28: #{multihead_attention_forward.3} parent=0 // pred_region
    _
  $region29: #{multihead_attention_forward.3} parent=0 // pred_fallthru
    _

// kernel: multihead_attention_forward.4
$region0: #{multihead_attention_forward.4}
  #allocation0 [shape = 'u32[]', space=smem, size = 0x4, offset = 0x4, fixed_abs, tag = 'smem constant byte address 0x4 - core index']
  #allocation1 [shape = 'u32[144,128]{1,0:T(1,128)}', space=vmem, size = 0x12000, scoped, tag = 'internal scratch']
  %s0 = inlined_call_operand.vmem [shape: bf16[2,8,32], index: 0, kind: input, shape index: {}]
  %s1 = inlined_call_operand.vmem [shape: bf16[2,8,32], index: 1, kind: input, shape index: {}]
  %s2 = inlined_call_operand.vmem [shape: bf16[2,8,32], index: 2, kind: input, shape index: {}]
  %s3 = inlined_call_operand.vmem [shape: f32[8,4], index: 3, kind: input, shape index: {}, may-alias: {3,5}]
  %s4 = inlined_call_operand.vmem [shape: f32[8,4], index: 4, kind: input, shape index: {}, may-alias: {4,6}]
  %s5 = inlined_call_operand.vmem [shape: f32[8,4], index: 5, kind: input, shape index: {}, may-alias: {3,5}]
  %s6 = inlined_call_operand.vmem [shape: f32[8,4], index: 6, kind: input, shape index: {}, may-alias: {4,6}]
  %s7 = inlined_call_operand.vmem [shape: bf16[2,8,32], index: 7, kind: output, shape index: {0}]
  %s8 = inlined_call_operand.hbm [shape: f32[2,8,8], index: 8, kind: output, shape index: {1}]
  %9 = xla_tuple %s7, %s8
  %s10 = sld [smem:[#allocation0]]
  $region69: #{multihead_attention_forward.4} parent=0
    _
  %s12 = ssub.s32 1, %s10
  %s13 = scalar_select 0, %s12, %s10
  $region1: #{multihead_attention_forward.4} parent=0
    #allocation2 [shape = 'u8[8192]{0}', space=vmem, size = 0x2000, scoped, tag = 'output window, operand 1']
    #allocation3 [shape = 's32[2]{0}', space=sflag, size = 0x8, scoped, tag = 'scoped memory for multihead_attention_forward.4']
    %14 = vsyncpa [#allocation3], 0
    %s15 = scalar_lea.sflag [#allocation3], 1
    %16 = vsyncpa %s15, 0
    loop: start=0, step=1, limit=4
    $region2: #{multihead_attention_forward.4} parent=1 // loop_pre_header
      _
    $region3: #{multihead_attention_forward.4} parent=1 // loop_header
      %s18 = sphi 0, %s22
      %p19 = scmp.ge.s32.totalorder %s18, 4
      %s25 = sphi 0, %s37
      %s26 = sphi 0, %s33
      %s27 = sphi 0, %s25
      %s28 = sphi 0, %s26
      %s29 = sphi 0, %s27
      %s30 = sphi 0, %s28
      %s42 = sphi 0, %s44
      %s45 = sphi 0, %s42
      %s46 = sphi 0, %s45
      %s62 = sphi 0, %s46
      %s68 = sphi 0, %s70
      %s71 = sphi 0, %s68
      %s72 = sphi 0, %s71
      %s88 = sphi 0, %s72
      %s94 = sphi 0, %s96
      %s97 = sphi 0, %s94
      %s98 = sphi 0, %s97
      %s114 = sphi 0, %s98
      %s120 = sphi 0, %s122
      %s123 = sphi 0, %s120
      %s124 = sphi 0, %s123
      %s140 = sphi 0, %s124
      %s146 = sphi 0, %s148
      %s149 = sphi 0, %s146
      %s150 = sphi 0, %s149
      %s166 = sphi 0, %s150
      %s170 = sphi 0, %s170
      %s172 = sphi 0, %s170
      %s173 = sphi 0, %s172
      %s187 = sphi 0, %s173
      %s191 = sphi 0, %s191
      %s193 = sphi 0, %s191
      %s194 = sphi 0, %s193
      %s208 = sphi 0, %s194
      %s216 = sphi 0, %s218
      %s219 = sphi 0, %s216
      %s220 = sphi 0, %s219
      %s236 = sphi 0, %s220
      %s244 = sphi 0, %s246
      %s247 = sphi 0, %s244
      %s248 = sphi 0, %s247
      %s264 = sphi 0, %s248
    $region4: #{multihead_attention_forward.4} parent=1 // loop_header_branch
      %21 = sbr.rel (%p19) target = $region8
    $region5: #{multihead_attention_forward.4} parent=1 // loop_body
      %s23 = ssub.s32 %s18, 1
      %s24 = ssub.s32 %s18, 2
      %s31 = sadd.s32 1, %s26
      %p32 = scmp.ge.s32.totalorder %s31, 1
      %s33 = scalar_select %p32, 0, %s31
      %s34 = sadd.s32 1, %s25
      %s35 = scalar_select %p32, %s34, %s25
      %p36 = scmp.ge.s32.totalorder %s35, 2
      %s37 = scalar_select %p36, 0, %s35
      %s38 = ssub.s32 %s25, %s37
      %s39 = ssub.s32 %s26, %s33
      %s40 = sor.u32 %s38, %s39
      %p41 = scmp.eq.s32.totalorder %s40, 0
      %s43 = sadd.s32 %s42, 1
      %s44 = scalar_select %p41, %s42, %s43
      %p47 = pneg %p41
      %p48 = scmp.eq.s32.totalorder %s18, 1
      %p49 = por %p47, %p48
      %p50 = scmp.ne.s32.totalorder %s42, %s45
      %p51 = scmp.eq.s32.totalorder %s18, 0
      %p52 = por %p50, %p51
      %p53 = scmp.ne.s32.totalorder %s42, %s45
      %p54 = scmp.eq.s32.totalorder %s23, 1
      %p55 = por %p53, %p54
      %p56 = scmp.ne.s32.totalorder %s45, %s46
      %p57 = scmp.eq.s32.totalorder %s23, 0
      %p58 = por %p56, %p57
      %p59 = scmp.ne.s32.totalorder %s45, %s46
      %p60 = scmp.eq.s32.totalorder %s24, 1
      %p61 = por %p59, %p60
      %p63 = scmp.ne.s32.totalorder %s46, %s62
      %p64 = scmp.eq.s32.totalorder %s24, 0
      %p65 = por %p63, %p64
      %s66 = ssub.s32 %s25, %s37
      %p67 = scmp.eq.s32.totalorder %s66, 0
      %s69 = sadd.s32 %s68, 1
      %s70 = scalar_select %p67, %s68, %s69
      %p73 = pneg %p67
      %p74 = scmp.eq.s32.totalorder %s18, 1
      %p75 = por %p73, %p74
      %p76 = scmp.ne.s32.totalorder %s68, %s71
      %p77 = scmp.eq.s32.totalorder %s18, 0
      %p78 = por %p76, %p77
      %p79 = scmp.ne.s32.totalorder %s68, %s71
      %p80 = scmp.eq.s32.totalorder %s23, 1
      %p81 = por %p79, %p80
      %p82 = scmp.ne.s32.totalorder %s71, %s72
      %p83 = scmp.eq.s32.totalorder %s23, 0
      %p84 = por %p82, %p83
      %p85 = scmp.ne.s32.totalorder %s71, %s72
      %p86 = scmp.eq.s32.totalorder %s24, 1
      %p87 = por %p85, %p86
      %p89 = scmp.ne.s32.totalorder %s72, %s88
      %p90 = scmp.eq.s32.totalorder %s24, 0
      %p91 = por %p89, %p90
      %s92 = ssub.s32 %s25, %s37
      %p93 = scmp.eq.s32.totalorder %s92, 0
      %s95 = sadd.s32 %s94, 1
      %s96 = scalar_select %p93, %s94, %s95
      %p99 = pneg %p93
      %p100 = scmp.eq.s32.totalorder %s18, 1
      %p101 = por %p99, %p100
      %p102 = scmp.ne.s32.totalorder %s94, %s97
      %p103 = scmp.eq.s32.totalorder %s18, 0
      %p104 = por %p102, %p103
      %p105 = scmp.ne.s32.totalorder %s94, %s97
      %p106 = scmp.eq.s32.totalorder %s23, 1
      %p107 = por %p105, %p106
      %p108 = scmp.ne.s32.totalorder %s97, %s98
      %p109 = scmp.eq.s32.totalorder %s23, 0
      %p110 = por %p108, %p109
      %p111 = scmp.ne.s32.totalorder %s97, %s98
      %p112 = scmp.eq.s32.totalorder %s24, 1
      %p113 = por %p111, %p112
      %p115 = scmp.ne.s32.totalorder %s98, %s114
      %p116 = scmp.eq.s32.totalorder %s24, 0
      %p117 = por %p115, %p116
      %s118 = ssub.s32 %s26, %s33
      %p119 = scmp.eq.s32.totalorder %s118, 0
      %s121 = sadd.s32 %s120, 1
      %s122 = scalar_select %p119, %s120, %s121
      %p125 = pneg %p119
      %p126 = scmp.eq.s32.totalorder %s18, 1
      %p127 = por %p125, %p126
      %p128 = scmp.ne.s32.totalorder %s120, %s123
      %p129 = scmp.eq.s32.totalorder %s18, 0
      %p130 = por %p128, %p129
      %p131 = scmp.ne.s32.totalorder %s120, %s123
      %p132 = scmp.eq.s32.totalorder %s23, 1
      %p133 = por %p131, %p132
      %p134 = scmp.ne.s32.totalorder %s123, %s124
      %p135 = scmp.eq.s32.totalorder %s23, 0
      %p136 = por %p134, %p135
      %p137 = scmp.ne.s32.totalorder %s123, %s124
      %p138 = scmp.eq.s32.totalorder %s24, 1
      %p139 = por %p137, %p138
      %p141 = scmp.ne.s32.totalorder %s124, %s140
      %p142 = scmp.eq.s32.totalorder %s24, 0
      %p143 = por %p141, %p142
      %s144 = ssub.s32 %s26, %s33
      %p145 = scmp.eq.s32.totalorder %s144, 0
      %s147 = sadd.s32 %s146, 1
      %s148 = scalar_select %p145, %s146, %s147
      %p151 = pneg %p145
      %p152 = scmp.eq.s32.totalorder %s18, 1
      %p153 = por %p151, %p152
      %p154 = scmp.ne.s32.totalorder %s146, %s149
      %p155 = scmp.eq.s32.totalorder %s18, 0
      %p156 = por %p154, %p155
      %p157 = scmp.ne.s32.totalorder %s146, %s149
      %p158 = scmp.eq.s32.totalorder %s23, 1
      %p159 = por %p157, %p158
      %p160 = scmp.ne.s32.totalorder %s149, %s150
      %p161 = scmp.eq.s32.totalorder %s23, 0
      %p162 = por %p160, %p161
      %p163 = scmp.ne.s32.totalorder %s149, %s150
      %p164 = scmp.eq.s32.totalorder %s24, 1
      %p165 = por %p163, %p164
      %p167 = scmp.ne.s32.totalorder %s150, %s166
      %p168 = scmp.eq.s32.totalorder %s24, 0
      %p169 = por %p167, %p168
      %s171 = sadd.s32 %s170, 1
      %p174 = scmp.eq.s32.totalorder %s18, 1
      %p175 = scmp.ne.s32.totalorder %s170, %s172
      %p176 = scmp.eq.s32.totalorder %s18, 0
      %p177 = por %p175, %p176
      %p178 = scmp.ne.s32.totalorder %s170, %s172
      %p179 = scmp.eq.s32.totalorder %s23, 1
      %p180 = por %p178, %p179
      %p181 = scmp.ne.s32.totalorder %s172, %s173
      %p182 = scmp.eq.s32.totalorder %s23, 0
      %p183 = por %p181, %p182
      %p184 = scmp.ne.s32.totalorder %s172, %s173
      %p185 = scmp.eq.s32.totalorder %s24, 1
      %p186 = por %p184, %p185
      %p188 = scmp.ne.s32.totalorder %s173, %s187
      %p189 = scmp.eq.s32.totalorder %s24, 0
      %p190 = por %p188, %p189
      %s192 = sadd.s32 %s191, 1
      %p195 = scmp.eq.s32.totalorder %s18, 1
      %p196 = scmp.ne.s32.totalorder %s191, %s193
      %p197 = scmp.eq.s32.totalorder %s18, 0
      %p198 = por %p196, %p197
      %p199 = scmp.ne.s32.totalorder %s191, %s193
      %p200 = scmp.eq.s32.totalorder %s23, 1
      %p201 = por %p199, %p200
      %p202 = scmp.ne.s32.totalorder %s193, %s194
      %p203 = scmp.eq.s32.totalorder %s23, 0
      %p204 = por %p202, %p203
      %p205 = scmp.ne.s32.totalorder %s193, %s194
      %p206 = scmp.eq.s32.totalorder %s24, 1
      %p207 = por %p205, %p206
      %p209 = scmp.ne.s32.totalorder %s194, %s208
      %p210 = scmp.eq.s32.totalorder %s24, 0
      %p211 = por %p209, %p210
      %s212 = ssub.s32 %s25, %s37
      %s213 = ssub.s32 %s26, %s33
      %s214 = sor.u32 %s212, %s213
      %p215 = scmp.eq.s32.totalorder %s214, 0
      %s217 = sadd.s32 %s216, 1
      %s218 = scalar_select %p215, %s216, %s217
      %p221 = pneg %p215
      %p222 = scmp.eq.s32.totalorder %s18, 1
      %p223 = por %p221, %p222
      %p224 = scmp.ne.s32.totalorder %s216, %s219
      %p225 = scmp.eq.s32.totalorder %s18, 0
      %p226 = por %p224, %p225
      %p227 = scmp.ne.s32.totalorder %s216, %s219
      %p228 = scmp.eq.s32.totalorder %s23, 1
      %p229 = por %p227, %p228
      %p230 = scmp.ne.s32.totalorder %s219, %s220
      %p231 = scmp.eq.s32.totalorder %s23, 0
      %p232 = por %p230, %p231
      %p233 = scmp.ne.s32.totalorder %s219, %s220
      %p234 = scmp.eq.s32.totalorder %s24, 1
      %p235 = por %p233, %p234
      %p237 = scmp.ne.s32.totalorder %s220, %s236
      %p238 = scmp.eq.s32.totalorder %s24, 0
      %p239 = por %p237, %p238
      %s240 = ssub.s32 %s25, %s37
      %s241 = ssub.s32 %s26, %s33
      %s242 = sor.u32 %s240, %s241
      %p243 = scmp.eq.s32.totalorder %s242, 0
      %s245 = sadd.s32 %s244, 1
      %s246 = scalar_select %p243, %s244, %s245
      %p249 = pneg %p243
      %p250 = scmp.eq.s32.totalorder %s18, 1
      %p251 = por %p249, %p250
      %p252 = scmp.ne.s32.totalorder %s244, %s247
      %p253 = scmp.eq.s32.totalorder %s18, 0
      %p254 = por %p252, %p253
      %p255 = scmp.ne.s32.totalorder %s244, %s247
      %p256 = scmp.eq.s32.totalorder %s23, 1
      %p257 = por %p255, %p256
      %p258 = scmp.ne.s32.totalorder %s247, %s248
      %p259 = scmp.eq.s32.totalorder %s23, 0
      %p260 = por %p258, %p259
      %p261 = scmp.ne.s32.totalorder %s247, %s248
      %p262 = scmp.eq.s32.totalorder %s24, 1
      %p263 = por %p261, %p262
      %p265 = scmp.ne.s32.totalorder %s248, %s264
      %p266 = scmp.eq.s32.totalorder %s24, 0
      %p267 = por %p265, %p266
      %p268 = scmp.le.s32.totalorder 1, %s18
      %p269 = scmp.lt.s32.totalorder %s18, 3
      %p270 = pnand %p268, %p269
      %p271 = pneg %p270
      // Predicated region
      $region9: #{multihead_attention_forward.4} parent=5 // pred_check
        _
      $region10: #{multihead_attention_forward.4} parent=5 // pred_check_branch
        %273 = sbr.rel (%p270) target = $region12
      $region11: #{multihead_attention_forward.4} parent=5 // pred_region
        %s274 = ssub.s32 %s18, 1
        // Predicated region
        $region13: #{multihead_attention_forward.4} parent=11 // pred_check
          %p275 = pneg %p136
        $region14: #{multihead_attention_forward.4} parent=11 // pred_check_branch
          %277 = sbr.rel (%p275) target = $region16
        $region15: #{multihead_attention_forward.4} parent=11 // pred_region
          %p278 = scmp.lt.s32.totalorder %s28, 0
          %s279 = scalar_select %p278, %s28, 0
          %s280 = smul.addr %s279, 8
          %s281 = scalar_lea.vmem %s3, %s280
        $region16: #{multihead_attention_forward.4} parent=11 // pred_fallthru
          _
        // Predicated region
        $region17: #{multihead_attention_forward.4} parent=11 // pred_check
          %p282 = pneg %p162
        $region18: #{multihead_attention_forward.4} parent=11 // pred_check_branch
          %284 = sbr.rel (%p282) target = $region20
        $region19: #{multihead_attention_forward.4} parent=11 // pred_region
          %p285 = scmp.lt.s32.totalorder %s28, 0
          %s286 = scalar_select %p285, %s28, 0
          %s287 = smul.addr %s286, 8
          %s288 = scalar_lea.vmem %s4, %s287
        $region20: #{multihead_attention_forward.4} parent=11 // pred_fallthru
          _
        // Predicated region
        $region21: #{multihead_attention_forward.4} parent=11 // pred_check
          %p289 = pneg %p183
        $region22: #{multihead_attention_forward.4} parent=11 // pred_check_branch
          %291 = sbr.rel (%p289) target = $region24
        $region23: #{multihead_attention_forward.4} parent=11 // pred_region
          _
        $region24: #{multihead_attention_forward.4} parent=11 // pred_fallthru
          _
        // Predicated region
        $region25: #{multihead_attention_forward.4} parent=11 // pred_check
          %p292 = pneg %p204
        $region26: #{multihead_attention_forward.4} parent=11 // pred_check_branch
          %294 = sbr.rel (%p292) target = $region28
        $region27: #{multihead_attention_forward.4} parent=11 // pred_region
          _
        $region28: #{multihead_attention_forward.4} parent=11 // pred_fallthru
          _
      $region12: #{multihead_attention_forward.4} parent=5 // pred_fallthru
        _
      %p295 = scmp.lt.s32.totalorder %s18, 2
      // Predicated region
      $region29: #{multihead_attention_forward.4} parent=5 // pred_check
        %p296 = pneg %p295
      $region30: #{multihead_attention_forward.4} parent=5 // pred_check_branch
        %298 = sbr.rel (%p296) target = $region32
      $region31: #{multihead_attention_forward.4} parent=5 // pred_region
        // Predicated region
        $region33: #{multihead_attention_forward.4} parent=31 // pred_check
          %p299 = pneg %p52
        $region34: #{multihead_attention_forward.4} parent=31 // pred_check_branch
          %301 = sbr.rel (%p299) target = $region36
        $region35: #{multihead_attention_forward.4} parent=31 // pred_region
          %p302 = scmp.lt.s32.totalorder %s25, 1
          %s303 = scalar_select %p302, %s25, 1
          %p304 = scmp.lt.s32.totalorder %s26, 0
          %s305 = scalar_select %p304, %s26, 0
          %s306 = sadd.s32 %s305, %s303
          %s307 = smul.addr %s306, 4
          %s308 = scalar_lea.vmem %s0, %s307
        $region36: #{multihead_attention_forward.4} parent=31 // pred_fallthru
          _
        // Predicated region
        $region37: #{multihead_attention_forward.4} parent=31 // pred_check
          %p309 = pneg %p78
        $region38: #{multihead_attention_forward.4} parent=31 // pred_check_branch
          %311 = sbr.rel (%p309) target = $region40
        $region39: #{multihead_attention_forward.4} parent=31 // pred_region
          %p312 = scmp.lt.s32.totalorder %s25, 1
          %s313 = scalar_select %p312, %s25, 1
          %s314 = smul.addr %s313, 4
          %s315 = scalar_lea.vmem %s1, %s314
        $region40: #{multihead_attention_forward.4} parent=31 // pred_fallthru
          _
        // Predicated region
        $region41: #{multihead_attention_forward.4} parent=31 // pred_check
          %p316 = pneg %p104
        $region42: #{multihead_attention_forward.4} parent=31 // pred_check_branch
          %318 = sbr.rel (%p316) target = $region44
        $region43: #{multihead_attention_forward.4} parent=31 // pred_region
          %p319 = scmp.lt.s32.totalorder %s25, 1
          %s320 = scalar_select %p319, %s25, 1
          %s321 = smul.addr %s320, 4
          %s322 = scalar_lea.vmem %s2, %s321
        $region44: #{multihead_attention_forward.4} parent=31 // pred_fallthru
          _
      $region32: #{multihead_attention_forward.4} parent=5 // pred_fallthru
        _
      %p323 = scmp.le.s32.totalorder 1, %s18
      %p324 = scmp.lt.s32.totalorder %s18, 3
      %p325 = pnand %p323, %p324
      %p326 = pneg %p325
      // Predicated region
      $region45: #{multihead_attention_forward.4} parent=5 // pred_check
        _
      $region46: #{multihead_attention_forward.4} parent=5 // pred_check_branch
        %328 = sbr.rel (%p325) target = $region48
      $region47: #{multihead_attention_forward.4} parent=5 // pred_region
        %s329 = ssub.s32 %s18, 1
        %p330 = scmp.lt.s32.totalorder %s27, 1
        %s331 = scalar_select %p330, %s27, 1
        %p332 = scmp.lt.s32.totalorder %s28, 0
        %s333 = scalar_select %p332, %s28, 0
        %s334 = sadd.s32 %s333, %s331
        %s335 = smul.addr %s334, 4
        %s336 = scalar_lea.vmem %s0, %s335
        %p337 = pneg %p58
        %p338 = pneg %p55
        %p339 = scmp.lt.s32.totalorder %s27, 1
        %s340 = scalar_select %p339, %s27, 1
        %s341 = smul.addr %s340, 4
        %s342 = scalar_lea.vmem %s1, %s341
        %p343 = pneg %p84
        %p344 = pneg %p81
        %p345 = scmp.lt.s32.totalorder %s27, 1
        %s346 = scalar_select %p345, %s27, 1
        %s347 = smul.addr %s346, 4
        %s348 = scalar_lea.vmem %s2, %s347
        %p349 = pneg %p110
        %p350 = pneg %p107
        %p351 = scmp.lt.s32.totalorder %s28, 0
        %s352 = scalar_select %p351, %s28, 0
        %s353 = smul.addr %s352, 8
        %s354 = scalar_lea.vmem %s3, %s353
        %p355 = pneg %p136
        %p356 = pneg %p133
        %p357 = scmp.lt.s32.totalorder %s28, 0
        %s358 = scalar_select %p357, %s28, 0
        %s359 = smul.addr %s358, 8
        %s360 = scalar_lea.vmem %s4, %s359
        %p361 = pneg %p162
        %p362 = pneg %p159
        %p363 = pneg %p183
        %p364 = pneg %p180
        %p365 = pneg %p204
        %p366 = pneg %p201
        %p367 = pneg %p232
        %p368 = pneg %p229
        %p369 = scmp.lt.s32.totalorder %s27, 1
        %s370 = scalar_select %p369, %s27, 1
        %p371 = scmp.lt.s32.totalorder %s28, 0
        %s372 = scalar_select %p371, %s28, 0
        %s373 = sadd.s32 %s372, %s370
        %s374 = smul.addr %s373, 4
        %s375 = scalar_lea.vmem %s7, %s374
        %p376 = pneg %p260
        %p377 = pneg %p257
        %s378 = sand.u32 %s247, 1
        %s379 = scalar_lea.sflag [#allocation3], %s378
        %s380 = sand.u32 %s247, 1
        %s381 = smul.addr %s380, 8
        %s382 = scalar_lea.vmem [#allocation2], %s381
        %p383 = scmp.lt.s32.totalorder %s27, 1
        %s384 = scalar_select %p383, %s27, 1
        %p385 = scmp.lt.s32.totalorder %s28, 0
        %s386 = scalar_select %p385, %s28, 0
        %s387 = sadd.s32 %s386, %s384
        %s388 = smul.addr %s387, 4
        %s389 = scalar_lea.vmem %s0, %s388
        %p390 = scmp.lt.s32.totalorder %s27, 1
        %s391 = scalar_select %p390, %s27, 1
        %s392 = smul.addr %s391, 4
        %s393 = scalar_lea.vmem %s1, %s392
        %p394 = scmp.lt.s32.totalorder %s27, 1
        %s395 = scalar_select %p394, %s27, 1
        %s396 = smul.addr %s395, 4
        %s397 = scalar_lea.vmem %s2, %s396
        %p398 = scmp.lt.s32.totalorder %s28, 0
        %s399 = scalar_select %p398, %s28, 0
        %s400 = smul.addr %s399, 8
        %s401 = scalar_lea.vmem %s3, %s400
        %p402 = scmp.lt.s32.totalorder %s28, 0
        %s403 = scalar_select %p402, %s28, 0
        %s404 = smul.addr %s403, 8
        %s405 = scalar_lea.vmem %s4, %s404
        %p406 = scmp.lt.s32.totalorder %s27, 1
        %s407 = scalar_select %p406, %s27, 1
        %p408 = scmp.lt.s32.totalorder %s28, 0
        %s409 = scalar_select %p408, %s28, 0
        %s410 = sadd.s32 %s409, %s407
        %s411 = smul.addr %s410, 4
        %s412 = scalar_lea.vmem %s7, %s411
        %v414 = vld [vmem:[%s389] sm:$0xf]
        %416 = vrot.lane.b32.xlu0 %v414, 120
        %v417 = vpop.permute.xlu0 %416
        %418 = vrot.lane.b32.xlu0 %v414, 112
        %v419 = vpop.permute.xlu0 %418
        %420 = vrot.lane.b32.xlu0 %v414, 104
        %v421 = vpop.permute.xlu0 %420
        %v424 = vpack.i.b16 %v417, %v414
        %v425 = vshrl.u32 %v414, 16
        %v426 = vshrl.u32 %v417, 16
        %v427 = vpack.i.b16 %v426, %v425
        %v430 = vpack.i.b16 %v421, %v419
        %v431 = vshrl.u32 %v419, 16
        %v432 = vshrl.u32 %v421, 16
        %v433 = vpack.i.b16 %v432, %v431
        %v436 = vunpack.c.l.s4 1983009808
        %v437 = vunpack.c.0.s8 %v436
        %v438 = vlaneseq
        %v439 = vshrl.u32 %v438, 7
        %v440 = vsub.s32 %v437, %v439
        %v441 = vrot.slane %v424, %v440
        %v444 = vunpack.c.l.s4 1983009808
        %v445 = vunpack.c.0.s8 %v444
        %v446 = vlaneseq
        %v447 = vshrl.u32 %v446, 7
        %v448 = vsub.s32 %v445, %v447
        %v449 = vrot.slane %v430, %v448
        %v450 = vcombine.low %v441, %v449
        %v451 = vcombine.high %v441, %v449
        %v453 = vunpack.c.l.s4 1934713408
        %v454 = vunpack.c.0.s8 %v453
        %v455 = vlaneseq
        %v456 = vshrl.u32 %v455, 7
        %v457 = vsub.s32 %v454, %v456
        %v458 = vrot.slane %v450, %v457
        %v460 = vunpack.c.l.s4 1934713408
        %v461 = vunpack.c.0.s8 %v460
        %v462 = vlaneseq
        %v463 = vshrl.u32 %v462, 7
        %v464 = vsub.s32 %v461, %v463
        %v465 = vrot.slane %v451, %v464
        %v466 = vcombine.high %v458, 0
        %v467 = vcombine.high %v465, 0
        %v470 = vunpack.c.l.s4 1983009808
        %v471 = vunpack.c.0.s8 %v470
        %v472 = vlaneseq
        %v473 = vshrl.u32 %v472, 7
        %v474 = vsub.s32 %v471, %v473
        %v475 = vrot.slane %v427, %v474
        %v478 = vunpack.c.l.s4 1983009808
        %v479 = vunpack.c.0.s8 %v478
        %v480 = vlaneseq
        %v481 = vshrl.u32 %v480, 7
        %v482 = vsub.s32 %v479, %v481
        %v483 = vrot.slane %v433, %v482
        %v484 = vcombine.low %v475, %v483
        %v485 = vcombine.high %v475, %v483
        %v487 = vunpack.c.l.s4 1934713408
        %v488 = vunpack.c.0.s8 %v487
        %v489 = vlaneseq
        %v490 = vshrl.u32 %v489, 7
        %v491 = vsub.s32 %v488, %v490
        %v492 = vrot.slane %v484, %v491
        %v494 = vunpack.c.l.s4 1934713408
        %v495 = vunpack.c.0.s8 %v494
        %v496 = vlaneseq
        %v497 = vshrl.u32 %v496, 7
        %v498 = vsub.s32 %v495, %v497
        %v499 = vrot.slane %v485, %v498
        %v500 = vcombine.high %v492, 0
        %v501 = vcombine.high %v499, 0
        %v502 = vcombine.low %v458, %v465
        %v504 = vunpack.c.l.s4 1983009808
        %v505 = vunpack.c.0.s8 %v504
        %v506 = vlaneseq
        %v507 = vshrl.u32 %v506, 7
        %v508 = vsub.s32 %v505, %v507
        %v509 = vrot.slane %v502, %v508
        %v510 = vcombine.low %v466, %v467
        %v512 = vunpack.c.l.s4 1983009808
        %v513 = vunpack.c.0.s8 %v512
        %v514 = vlaneseq
        %v515 = vshrl.u32 %v514, 7
        %v516 = vsub.s32 %v513, %v515
        %v517 = vrot.slane %v510, %v516
        %v518 = vcombine.low %v509, %v517
        %v520 = vunpack.c.l.s4 1934713408
        %v521 = vunpack.c.0.s8 %v520
        %v522 = vlaneseq
        %v523 = vshrl.u32 %v522, 7
        %v524 = vsub.s32 %v521, %v523
        %v525 = vrot.slane %v518, %v524
        %v526 = vcombine.high %v525, 0
        %v527 = vcombine.low %v492, %v499
        %v529 = vunpack.c.l.s4 1983009808
        %v530 = vunpack.c.0.s8 %v529
        %v531 = vlaneseq
        %v532 = vshrl.u32 %v531, 7
        %v533 = vsub.s32 %v530, %v532
        %v534 = vrot.slane %v527, %v533
        %v535 = vcombine.low %v500, %v501
        %v537 = vunpack.c.l.s4 1983009808
        %v538 = vunpack.c.0.s8 %v537
        %v539 = vlaneseq
        %v540 = vshrl.u32 %v539, 7
        %v541 = vsub.s32 %v538, %v540
        %v542 = vrot.slane %v535, %v541
        %v543 = vcombine.low %v534, %v542
        %v545 = vunpack.c.l.s4 1934713408
        %v546 = vunpack.c.0.s8 %v545
        %v547 = vlaneseq
        %v548 = vshrl.u32 %v547, 7
        %v549 = vsub.s32 %v546, %v548
        %v550 = vrot.slane %v543, %v549
        %v551 = vcombine.high %v550, 0
        %v554 = vpack.i.b16 %v550, %v525
        %v556 = vshrl.u32 %v525, 16
        %v557 = vshrl.u32 %v550, 16
        %v558 = vpack.i.b16 %v557, %v556
        %v562 = vpack.i.b16 %v551, %v526
        %v564 = vshrl.u32 %v526, 16
        %v565 = vshrl.u32 %v551, 16
        %v566 = vpack.i.b16 %v565, %v564
        %v568 = vunpack.c.l.bf16 %v554
        %v569 = vunpack.c.l.bf16 %v558
        %v570 = vunpack.c.l.bf16 %v562
        %v571 = vunpack.c.l.bf16 %v566
        %v572 = vld [vmem:[%s393] sm:$0xf]
        %574 = vrot.lane.b32.xlu0 %v572, 120
        %v575 = vpop.permute.xlu0 %574
        %576 = vrot.lane.b32.xlu0 %v572, 112
        %v577 = vpop.permute.xlu0 %576
        %578 = vrot.lane.b32.xlu0 %v572, 104
        %v579 = vpop.permute.xlu0 %578
        %v582 = vpack.i.b16 %v575, %v572
        %v583 = vshrl.u32 %v572, 16
        %v584 = vshrl.u32 %v575, 16
        %v585 = vpack.i.b16 %v584, %v583
        %v588 = vpack.i.b16 %v579, %v577
        %v589 = vshrl.u32 %v577, 16
        %v590 = vshrl.u32 %v579, 16
        %v591 = vpack.i.b16 %v590, %v589
        %v594 = vunpack.c.l.s4 1983009808
        %v595 = vunpack.c.0.s8 %v594
        %v596 = vlaneseq
        %v597 = vshrl.u32 %v596, 7
        %v598 = vsub.s32 %v595, %v597
        %v599 = vrot.slane %v582, %v598
        %v602 = vunpack.c.l.s4 1983009808
        %v603 = vunpack.c.0.s8 %v602
        %v604 = vlaneseq
        %v605 = vshrl.u32 %v604, 7
        %v606 = vsub.s32 %v603, %v605
        %v607 = vrot.slane %v588, %v606
        %v608 = vcombine.low %v599, %v607
        %v609 = vcombine.high %v599, %v607
        %v611 = vunpack.c.l.s4 1934713408
        %v612 = vunpack.c.0.s8 %v611
        %v613 = vlaneseq
        %v614 = vshrl.u32 %v613, 7
        %v615 = vsub.s32 %v612, %v614
        %v616 = vrot.slane %v608, %v615
        %v618 = vunpack.c.l.s4 1934713408
        %v619 = vunpack.c.0.s8 %v618
        %v620 = vlaneseq
        %v621 = vshrl.u32 %v620, 7
        %v622 = vsub.s32 %v619, %v621
        %v623 = vrot.slane %v609, %v622
        %v624 = vcombine.high %v616, 0
        %v625 = vcombine.high %v623, 0
        %v628 = vunpack.c.l.s4 1983009808
        %v629 = vunpack.c.0.s8 %v628
        %v630 = vlaneseq
        %v631 = vshrl.u32 %v630, 7
        %v632 = vsub.s32 %v629, %v631
        %v633 = vrot.slane %v585, %v632
        %v636 = vunpack.c.l.s4 1983009808
        %v637 = vunpack.c.0.s8 %v636
        %v638 = vlaneseq
        %v639 = vshrl.u32 %v638, 7
        %v640 = vsub.s32 %v637, %v639
        %v641 = vrot.slane %v591, %v640
        %v642 = vcombine.low %v633, %v641
        %v643 = vcombine.high %v633, %v641
        %v645 = vunpack.c.l.s4 1934713408
        %v646 = vunpack.c.0.s8 %v645
        %v647 = vlaneseq
        %v648 = vshrl.u32 %v647, 7
        %v649 = vsub.s32 %v646, %v648
        %v650 = vrot.slane %v642, %v649
        %v652 = vunpack.c.l.s4 1934713408
        %v653 = vunpack.c.0.s8 %v652
        %v654 = vlaneseq
        %v655 = vshrl.u32 %v654, 7
        %v656 = vsub.s32 %v653, %v655
        %v657 = vrot.slane %v643, %v656
        %v658 = vcombine.high %v650, 0
        %v659 = vcombine.high %v657, 0
        %v660 = vcombine.low %v616, %v623
        %v662 = vunpack.c.l.s4 1983009808
        %v663 = vunpack.c.0.s8 %v662
        %v664 = vlaneseq
        %v665 = vshrl.u32 %v664, 7
        %v666 = vsub.s32 %v663, %v665
        %v667 = vrot.slane %v660, %v666
        %v668 = vcombine.low %v624, %v625
        %v670 = vunpack.c.l.s4 1983009808
        %v671 = vunpack.c.0.s8 %v670
        %v672 = vlaneseq
        %v673 = vshrl.u32 %v672, 7
        %v674 = vsub.s32 %v671, %v673
        %v675 = vrot.slane %v668, %v674
        %v676 = vcombine.low %v667, %v675
        %v678 = vunpack.c.l.s4 1934713408
        %v679 = vunpack.c.0.s8 %v678
        %v680 = vlaneseq
        %v681 = vshrl.u32 %v680, 7
        %v682 = vsub.s32 %v679, %v681
        %v683 = vrot.slane %v676, %v682
        %v684 = vcombine.high %v683, 0
        %v685 = vcombine.low %v650, %v657
        %v687 = vunpack.c.l.s4 1983009808
        %v688 = vunpack.c.0.s8 %v687
        %v689 = vlaneseq
        %v690 = vshrl.u32 %v689, 7
        %v691 = vsub.s32 %v688, %v690
        %v692 = vrot.slane %v685, %v691
        %v693 = vcombine.low %v658, %v659
        %v695 = vunpack.c.l.s4 1983009808
        %v696 = vunpack.c.0.s8 %v695
        %v697 = vlaneseq
        %v698 = vshrl.u32 %v697, 7
        %v699 = vsub.s32 %v696, %v698
        %v700 = vrot.slane %v693, %v699
        %v701 = vcombine.low %v692, %v700
        %v703 = vunpack.c.l.s4 1934713408
        %v704 = vunpack.c.0.s8 %v703
        %v705 = vlaneseq
        %v706 = vshrl.u32 %v705, 7
        %v707 = vsub.s32 %v704, %v706
        %v708 = vrot.slane %v701, %v707
        %v709 = vcombine.high %v708, 0
        %v712 = vpack.i.b16 %v708, %v683
        %v714 = vshrl.u32 %v683, 16
        %v715 = vshrl.u32 %v708, 16
        %v716 = vpack.i.b16 %v715, %v714
        %v720 = vpack.i.b16 %v709, %v684
        %v722 = vshrl.u32 %v684, 16
        %v723 = vshrl.u32 %v709, 16
        %v724 = vpack.i.b16 %v723, %v722
        %v726 = vunpack.c.l.bf16 %v712
        %v727 = vunpack.c.l.bf16 %v716
        %v728 = vunpack.c.l.bf16 %v720
        %v729 = vunpack.c.l.bf16 %v724
        %v730 = vld [vmem:[%s401] sm:$0xff]
        %v731 = vld [vmem:[%s405] sm:$0xff]
        %v732 = vld [vmem:[%s5] sm:$0xff]
        %v733 = vld [vmem:[%s6] sm:$0xff]
        %v734 = vmul.f32 %v568, %v730
        %v735 = vmul.f32 %v569, %v730
        %v736 = vmul.f32 %v570, %v730
        %v737 = vmul.f32 %v571, %v730
        %739 = vrot.lane.b32.xlu0 %v731, 4
        %v740 = vpop.permute.xlu0 %739
        %v742 = vmul.f32 %v568, %v740
        %v743 = vmul.f32 %v569, %v740
        %v744 = vmul.f32 %v570, %v740
        %v745 = vmul.f32 %v571, %v740
        %750 = vrot.lane.b32.xlu0 %v742, 124
        %v751 = vpop.permute.xlu0 %750
        %752 = vrot.lane.b32.xlu0 %v743, 124
        %v753 = vpop.permute.xlu0 %752
        %754 = vrot.lane.b32.xlu0 %v744, 124
        %v755 = vpop.permute.xlu0 %754
        %756 = vrot.lane.b32.xlu0 %v745, 124
        %v757 = vpop.permute.xlu0 %756
        %v762 = vsub.f32 %v734, %v751
        %v763 = vsub.f32 %v735, %v753
        %v764 = vsub.f32 %v736, %v755
        %v765 = vsub.f32 %v737, %v757
        %v766 = vmul.f32 %v568, %v731
        %v767 = vmul.f32 %v569, %v731
        %v768 = vmul.f32 %v570, %v731
        %v769 = vmul.f32 %v571, %v731
        %771 = vrot.lane.b32.xlu0 %v730, 4
        %v772 = vpop.permute.xlu0 %771
        %v774 = vmul.f32 %v568, %v772
        %v775 = vmul.f32 %v569, %v772
        %v776 = vmul.f32 %v570, %v772
        %v777 = vmul.f32 %v571, %v772
        %782 = vrot.lane.b32.xlu0 %v774, 124
        %v783 = vpop.permute.xlu0 %782
        %784 = vrot.lane.b32.xlu0 %v775, 124
        %v785 = vpop.permute.xlu0 %784
        %786 = vrot.lane.b32.xlu0 %v776, 124
        %v787 = vpop.permute.xlu0 %786
        %788 = vrot.lane.b32.xlu0 %v777, 124
        %v789 = vpop.permute.xlu0 %788
        %v794 = vadd.f32 %v766, %v783
        %v795 = vadd.f32 %v767, %v785
        %v796 = vadd.f32 %v768, %v787
        %v797 = vadd.f32 %v769, %v789
        %802 = vrot.lane.b32.xlu0 %v794, 4
        %v803 = vpop.permute.xlu0 %802
        %804 = vrot.lane.b32.xlu0 %v795, 4
        %v805 = vpop.permute.xlu0 %804
        %806 = vrot.lane.b32.xlu0 %v796, 4
        %v807 = vpop.permute.xlu0 %806
        %808 = vrot.lane.b32.xlu0 %v797, 4
        %v809 = vpop.permute.xlu0 %808
        %vm814 = vcmask 31744
        %v815 = vsel %vm814, %v762, %v803
        %v816 = vsel %vm814, %v763, %v805
        %v817 = vsel %vm814, %v764, %v807
        %v818 = vsel %vm814, %v765, %v809
        %v819 = vmul.f32 %v726, %v732
        %v820 = vmul.f32 %v727, %v732
        %v821 = vmul.f32 %v728, %v732
        %v822 = vmul.f32 %v729, %v732
        %824 = vrot.lane.b32.xlu0 %v733, 4
        %v825 = vpop.permute.xlu0 %824
        %v827 = vmul.f32 %v726, %v825
        %v828 = vmul.f32 %v727, %v825
        %v829 = vmul.f32 %v728, %v825
        %v830 = vmul.f32 %v729, %v825
        %835 = vrot.lane.b32.xlu0 %v827, 124
        %v836 = vpop.permute.xlu0 %835
        %837 = vrot.lane.b32.xlu0 %v828, 124
        %v838 = vpop.permute.xlu0 %837
        %839 = vrot.lane.b32.xlu0 %v829, 124
        %v840 = vpop.permute.xlu0 %839
        %841 = vrot.lane.b32.xlu0 %v830, 124
        %v842 = vpop.permute.xlu0 %841
        %v847 = vsub.f32 %v819, %v836
        %v848 = vsub.f32 %v820, %v838
        %v849 = vsub.f32 %v821, %v840
        %v850 = vsub.f32 %v822, %v842
        %v851 = vmul.f32 %v726, %v733
        %v852 = vmul.f32 %v727, %v733
        %v853 = vmul.f32 %v728, %v733
        %v854 = vmul.f32 %v729, %v733
        %856 = vrot.lane.b32.xlu0 %v732, 4
        %v857 = vpop.permute.xlu0 %856
        %v859 = vmul.f32 %v726, %v857
        %v860 = vmul.f32 %v727, %v857
        %v861 = vmul.f32 %v728, %v857
        %v862 = vmul.f32 %v729, %v857
        %867 = vrot.lane.b32.xlu0 %v859, 124
        %v868 = vpop.permute.xlu0 %867
        %869 = vrot.lane.b32.xlu0 %v860, 124
        %v870 = vpop.permute.xlu0 %869
        %871 = vrot.lane.b32.xlu0 %v861, 124
        %v872 = vpop.permute.xlu0 %871
        %873 = vrot.lane.b32.xlu0 %v862, 124
        %v874 = vpop.permute.xlu0 %873
        %v879 = vadd.f32 %v851, %v868
        %v880 = vadd.f32 %v852, %v870
        %v881 = vadd.f32 %v853, %v872
        %v882 = vadd.f32 %v854, %v874
        %887 = vrot.lane.b32.xlu0 %v879, 4
        %v888 = vpop.permute.xlu0 %887
        %889 = vrot.lane.b32.xlu0 %v880, 4
        %v890 = vpop.permute.xlu0 %889
        %891 = vrot.lane.b32.xlu0 %v881, 4
        %v892 = vpop.permute.xlu0 %891
        %893 = vrot.lane.b32.xlu0 %v882, 4
        %v894 = vpop.permute.xlu0 %893
        %v899 = vsel %vm814, %v847, %v888
        %v900 = vsel %vm814, %v848, %v890
        %v901 = vsel %vm814, %v849, %v892
        %v902 = vsel %vm814, %v850, %v894
        %v903 = vpack.c.bf16 %v815, %v815
        %v904 = vpack.c.bf16 %v816, %v816
        %v905 = vpack.c.bf16 %v817, %v817
        %v906 = vpack.c.bf16 %v818, %v818
        %v907 = vpack.c.bf16 %v899, %v899
        %v908 = vpack.c.bf16 %v900, %v900
        %v909 = vpack.c.bf16 %v901, %v901
        %v910 = vpack.c.bf16 %v902, %v902
        %vm911 = vcmask 64512
        %v913 = vsel %vm911, %v903, 0
        %v916 = vsel %vm911, %v907, 0
        %918 = vmatprep.subr.bf16.mxu0 0
        %919 = vmatpush1.bf16.xpose.msra.mxu0 %v916
        %920 = vmatprep.subr.bf16.mxu0 0
        %921 = vmatpush1.bf16.xpose.msra.mxu0 0
        %922 = vmatprep.subr.bf16.mxu0 0
        %923 = vmatpush1.bf16.xpose.msra.mxu0 0
        %924 = vmatprep.subr.bf16.mxu0 0
        %925 = vmatpush1.bf16.xpose.msra.mxu0 0
        %926 = vmatprep.subr.bf16.mxu0 0
        %927 = vmatpush1.bf16.xpose.msra.mxu0 0
        %928 = vmatprep.subr.bf16.mxu0 0
        %929 = vmatpush1.bf16.xpose.msra.mxu0 0
        %930 = vmatprep.subr.bf16.mxu0 0
        %931 = vmatpush1.bf16.xpose.msra.mxu0 0
        %932 = vmatprep.subr.bf16.mxu0 0
        %933 = vmatpush1.bf16.xpose.msra.mxu0 0
        %934 = vmatprep.subr.bf16.mxu0 0
        %935 = vmatpush1.bf16.xpose.msra.mxu0 0
        %936 = vmatprep.subr.bf16.mxu0 0
        %937 = vmatpush1.bf16.xpose.msra.mxu0 0
        %938 = vmatprep.subr.bf16.mxu0 0
        %939 = vmatpush1.bf16.xpose.msra.mxu0 0
        %940 = vmatprep.subr.bf16.mxu0 0
        %941 = vmatpush1.bf16.xpose.msra.mxu0 0
        %942 = vmatprep.subr.bf16.mxu0 0
        %943 = vmatpush1.bf16.xpose.msra.mxu0 0
        %944 = vmatprep.subr.bf16.mxu0 0
        %945 = vmatpush1.bf16.xpose.msra.mxu0 0
        %946 = vmatprep.subr.bf16.mxu0 0
        %947 = vmatpush1.bf16.xpose.msra.mxu0 0
        %948 = vmatprep.subr.bf16.mxu0 0
        %949 = vmatpush1.bf16.xpose.msra.mxu0 0
        %950 = vmatprep.mubr.bf16.mxu0 0
        %951 = vmatmul.mubr.bf16.gmra.mrb[0].mxu0 %v913
        %v952 = vpop.f32.mrb[0].mxu0
        %v953 = vadd.f32 0.0, %v952
        %v954 = vpop.f32.mrb[0].mxu0
        %v955 = vpop.f32.mrb[0].mxu0
        %v956 = vpop.f32.mrb[0].mxu0
        %957 = vdwg.mxu0
        %v959 = vsel %vm911, %v904, 0
        %v962 = vsel %vm911, %v908, 0
        %964 = vmatprep.subr.bf16.mxu0 0
        %965 = vmatpush1.bf16.xpose.msra.mxu0 %v962
        %966 = vmatprep.subr.bf16.mxu0 0
        %967 = vmatpush1.bf16.xpose.msra.mxu0 0
        %968 = vmatprep.subr.bf16.mxu0 0
        %969 = vmatpush1.bf16.xpose.msra.mxu0 0
        %970 = vmatprep.subr.bf16.mxu0 0
        %971 = vmatpush1.bf16.xpose.msra.mxu0 0
        %972 = vmatprep.subr.bf16.mxu0 0
        %973 = vmatpush1.bf16.xpose.msra.mxu0 0
        %974 = vmatprep.subr.bf16.mxu0 0
        %975 = vmatpush1.bf16.xpose.msra.mxu0 0
        %976 = vmatprep.subr.bf16.mxu0 0
        %977 = vmatpush1.bf16.xpose.msra.mxu0 0
        %978 = vmatprep.subr.bf16.mxu0 0
        %979 = vmatpush1.bf16.xpose.msra.mxu0 0
        %980 = vmatprep.subr.bf16.mxu0 0
        %981 = vmatpush1.bf16.xpose.msra.mxu0 0
        %982 = vmatprep.subr.bf16.mxu0 0
        %983 = vmatpush1.bf16.xpose.msra.mxu0 0
        %984 = vmatprep.subr.bf16.mxu0 0
        %985 = vmatpush1.bf16.xpose.msra.mxu0 0
        %986 = vmatprep.subr.bf16.mxu0 0
        %987 = vmatpush1.bf16.xpose.msra.mxu0 0
        %988 = vmatprep.subr.bf16.mxu0 0
        %989 = vmatpush1.bf16.xpose.msra.mxu0 0
        %990 = vmatprep.subr.bf16.mxu0 0
        %991 = vmatpush1.bf16.xpose.msra.mxu0 0
        %992 = vmatprep.subr.bf16.mxu0 0
        %993 = vmatpush1.bf16.xpose.msra.mxu0 0
        %994 = vmatprep.subr.bf16.mxu0 0
        %995 = vmatpush1.bf16.xpose.msra.mxu0 0
        %996 = vmatprep.mubr.bf16.mxu0 0
        %997 = vmatmul.mubr.bf16.gmra.mrb[0].mxu0 %v959
        %v998 = vpop.f32.mrb[0].mxu0
        %v999 = vadd.f32 0.0, %v998
        %v1000 = vpop.f32.mrb[0].mxu0
        %v1001 = vpop.f32.mrb[0].mxu0
        %v1002 = vpop.f32.mrb[0].mxu0
        %1003 = vdwg.mxu0
        %v1005 = vsel %vm911, %v905, 0
        %v1008 = vsel %vm911, %v909, 0
        %1010 = vmatprep.subr.bf16.mxu0 0
        %1011 = vmatpush1.bf16.xpose.msra.mxu0 %v1008
        %1012 = vmatprep.subr.bf16.mxu0 0
        %1013 = vmatpush1.bf16.xpose.msra.mxu0 0
        %1014 = vmatprep.subr.bf16.mxu0 0
        %1015 = vmatpush1.bf16.xpose.msra.mxu0 0
        %1016 = vmatprep.subr.bf16.mxu0 0
        %1017 = vmatpush1.bf16.xpose.msra.mxu0 0
        %1018 = vmatprep.subr.bf16.mxu0 0
        %1019 = vmatpush1.bf16.xpose.msra.mxu0 0
        %1020 = vmatprep.subr.bf16.mxu0 0
        %1021 = vmatpush1.bf16.xpose.msra.mxu0 0
        %1022 = vmatprep.subr.bf16.mxu0 0
        %1023 = vmatpush1.bf16.xpose.msra.mxu0 0
        %1024 = vmatprep.subr.bf16.mxu0 0
        %1025 = vmatpush1.bf16.xpose.msra.mxu0 0
        %1026 = vmatprep.subr.bf16.mxu0 0
        %1027 = vmatpush1.bf16.xpose.msra.mxu0 0
        %1028 = vmatprep.subr.bf16.mxu0 0
        %1029 = vmatpush1.bf16.xpose.msra.mxu0 0
        %1030 = vmatprep.subr.bf16.mxu0 0
        %1031 = vmatpush1.bf16.xpose.msra.mxu0 0
        %1032 = vmatprep.subr.bf16.mxu0 0
        %1033 = vmatpush1.bf16.xpose.msra.mxu0 0
        %1034 = vmatprep.subr.bf16.mxu0 0
        %1035 = vmatpush1.bf16.xpose.msra.mxu0 0
        %1036 = vmatprep.subr.bf16.mxu0 0
        %1037 = vmatpush1.bf16.xpose.msra.mxu0 0
        %1038 = vmatprep.subr.bf16.mxu0 0
        %1039 = vmatpush1.bf16.xpose.msra.mxu0 0
        %1040 = vmatprep.subr.bf16.mxu0 0
        %1041 = vmatpush1.bf16.xpose.msra.mxu0 0
        %1042 = vmatprep.mubr.bf16.mxu0 0
        %1043 = vmatmul.mubr.bf16.gmra.mrb[0].mxu0 %v1005
        %v1044 = vpop.f32.mrb[0].mxu0
        %v1045 = vadd.f32 0.0, %v1044
        %v1046 = vpop.f32.mrb[0].mxu0
        %v1047 = vpop.f32.mrb[0].mxu0
        %v1048 = vpop.f32.mrb[0].mxu0
        %1049 = vdwg.mxu0
        %v1051 = vsel %vm911, %v906, 0
        %v1054 = vsel %vm911, %v910, 0
        %1056 = vmatprep.subr.bf16.mxu0 0
        %1057 = vmatpush1.bf16.xpose.msra.mxu0 %v1054
        %1058 = vmatprep.subr.bf16.mxu0 0
        %1059 = vmatpush1.bf16.xpose.msra.mxu0 0
        %1060 = vmatprep.subr.bf16.mxu0 0
        %1061 = vmatpush1.bf16.xpose.msra.mxu0 0
        %1062 = vmatprep.subr.bf16.mxu0 0
        %1063 = vmatpush1.bf16.xpose.msra.mxu0 0
        %1064 = vmatprep.subr.bf16.mxu0 0
        %1065 = vmatpush1.bf16.xpose.msra.mxu0 0
        %1066 = vmatprep.subr.bf16.mxu0 0
        %1067 = vmatpush1.bf16.xpose.msra.mxu0 0
        %1068 = vmatprep.subr.bf16.mxu0 0
        %1069 = vmatpush1.bf16.xpose.msra.mxu0 0
        %1070 = vmatprep.subr.bf16.mxu0 0
        %1071 = vmatpush1.bf16.xpose.msra.mxu0 0
        %1072 = vmatprep.subr.bf16.mxu0 0
        %1073 = vmatpush1.bf16.xpose.msra.mxu0 0
        %1074 = vmatprep.subr.bf16.mxu0 0
        %1075 = vmatpush1.bf16.xpose.msra.mxu0 0
        %1076 = vmatprep.subr.bf16.mxu0 0
        %1077 = vmatpush1.bf16.xpose.msra.mxu0 0
        %1078 = vmatprep.subr.bf16.mxu0 0
        %1079 = vmatpush1.bf16.xpose.msra.mxu0 0
        %1080 = vmatprep.subr.bf16.mxu0 0
        %1081 = vmatpush1.bf16.xpose.msra.mxu0 0
        %1082 = vmatprep.subr.bf16.mxu0 0
        %1083 = vmatpush1.bf16.xpose.msra.mxu0 0
        %1084 = vmatprep.subr.bf16.mxu0 0
        %1085 = vmatpush1.bf16.xpose.msra.mxu0 0
        %1086 = vmatprep.subr.bf16.mxu0 0
        %1087 = vmatpush1.bf16.xpose.msra.mxu0 0
        %1088 = vmatprep.mubr.bf16.mxu0 0
        %1089 = vmatmul.mubr.bf16.gmra.mrb[0].mxu0 %v1051
        %v1090 = vpop.f32.mrb[0].mxu0
        %v1091 = vadd.f32 0.0, %v1090
        %v1092 = vpop.f32.mrb[0].mxu0
        %v1093 = vpop.f32.mrb[0].mxu0
        %v1094 = vpop.f32.mrb[0].mxu0
        %1095 = vdwg.mxu0
        %v1096 = vsel %vm911, %v953, -inf
        %1097 = vmax.xlane.f32.xlu0 %v1096
        %v1098 = vpop.xlane.xlu0 %1097
        %v1099 = vsel %vm911, %v999, -inf
        %1100 = vmax.xlane.f32.xlu0 %v1099
        %v1101 = vpop.xlane.xlu0 %1100
        %v1102 = vsel %vm911, %v1045, -inf
        %1103 = vmax.xlane.f32.xlu0 %v1102
        %v1104 = vpop.xlane.xlu0 %1103
        %v1105 = vsel %vm911, %v1091, -inf
        %1106 = vmax.xlane.f32.xlu0 %v1105
        %v1107 = vpop.xlane.xlu0 %1106
        %v1108 = vsub.f32 %v953, %v1098
        %v1109 = vsub.f32 %v999, %v1101
        %v1110 = vsub.f32 %v1045, %v1104
        %v1111 = vsub.f32 %v1091, %v1107
        %v1112 = vmul.f32 %v1108, 1.442695
        %v1113 = vpow.pop %v1112
        %v1114 = vmul.f32 %v1109, 1.442695
        %v1115 = vpow.pop %v1114
        %v1116 = vmul.f32 %v1110, 1.442695
        %v1117 = vpow.pop %v1116
        %v1118 = vmul.f32 %v1111, 1.442695
        %v1119 = vpow.pop %v1118
        %v1120 = vsel %vm911, %v1113, 0.0
        %1121 = vadd.xlane.f32.xlu0 %v1120
        %v1122 = vpop.xlane.xlu0 %1121
        %v1123 = vsel %vm911, %v1115, 0.0
        %1124 = vadd.xlane.f32.xlu0 %v1123
        %v1125 = vpop.xlane.xlu0 %1124
        %v1126 = vsel %vm911, %v1117, 0.0
        %1127 = vadd.xlane.f32.xlu0 %v1126
        %v1128 = vpop.xlane.xlu0 %1127
        %v1129 = vsel %vm911, %v1119, 0.0
        %1130 = vadd.xlane.f32.xlu0 %v1129
        %v1131 = vpop.xlane.xlu0 %1130
        %v1132 = vrcp.pop %v1122
        %v1133 = vmul.f32 %v1113, %v1132
        %v1134 = vrcp.pop %v1125
        %v1135 = vmul.f32 %v1115, %v1134
        %v1136 = vrcp.pop %v1128
        %v1137 = vmul.f32 %v1117, %v1136
        %v1138 = vrcp.pop %v1131
        %v1139 = vmul.f32 %v1119, %v1138
        %v1140 = vsel %vm911, %v1133, 0.0
        %v1141 = vsel %vm911, %v1135, 0.0
        %v1142 = vadd.f32 %v1140, %v1141
        %v1143 = vsel %vm911, %v1137, 0.0
        %v1144 = vadd.f32 %v1142, %v1143
        %v1145 = vsel %vm911, %v1139, 0.0
        %v1146 = vadd.f32 %v1144, %v1145
        %v1147 = vmul.f32 %v1146, 0.25
        %1148 = vst.msk [vmem:[%s382] sm:$0xff] %vm911, %v1147
        %v1149 = vld [vmem:[%s397] sm:$0xf]
        %1151 = vrot.lane.b32.xlu0 %v1149, 120
        %v1152 = vpop.permute.xlu0 %1151
        %1153 = vrot.lane.b32.xlu0 %v1149, 112
        %v1154 = vpop.permute.xlu0 %1153
        %1155 = vrot.lane.b32.xlu0 %v1149, 104
        %v1156 = vpop.permute.xlu0 %1155
        %v1159 = vpack.i.b16 %v1152, %v1149
        %v1160 = vshrl.u32 %v1149, 16
        %v1161 = vshrl.u32 %v1152, 16
        %v1162 = vpack.i.b16 %v1161, %v1160
        %v1165 = vpack.i.b16 %v1156, %v1154
        %v1166 = vshrl.u32 %v1154, 16
        %v1167 = vshrl.u32 %v1156, 16
        %v1168 = vpack.i.b16 %v1167, %v1166
        %v1171 = vunpack.c.l.s4 1983009808
        %v1172 = vunpack.c.0.s8 %v1171
        %v1173 = vlaneseq
        %v1174 = vshrl.u32 %v1173, 7
        %v1175 = vsub.s32 %v1172, %v1174
        %v1176 = vrot.slane %v1159, %v1175
        %v1179 = vunpack.c.l.s4 1983009808
        %v1180 = vunpack.c.0.s8 %v1179
        %v1181 = vlaneseq
        %v1182 = vshrl.u32 %v1181, 7
        %v1183 = vsub.s32 %v1180, %v1182
        %v1184 = vrot.slane %v1165, %v1183
        %v1185 = vcombine.low %v1176, %v1184
        %v1186 = vcombine.high %v1176, %v1184
        %v1188 = vunpack.c.l.s4 1934713408
        %v1189 = vunpack.c.0.s8 %v1188
        %v1190 = vlaneseq
        %v1191 = vshrl.u32 %v1190, 7
        %v1192 = vsub.s32 %v1189, %v1191
        %v1193 = vrot.slane %v1185, %v1192
        %v1195 = vunpack.c.l.s4 1934713408
        %v1196 = vunpack.c.0.s8 %v1195
        %v1197 = vlaneseq
        %v1198 = vshrl.u32 %v1197, 7
        %v1199 = vsub.s32 %v1196, %v1198
        %v1200 = vrot.slane %v1186, %v1199
        %v1201 = vcombine.high %v1193, 0
        %v1202 = vcombine.high %v1200, 0
        %v1205 = vunpack.c.l.s4 1983009808
        %v1206 = vunpack.c.0.s8 %v1205
        %v1207 = vlaneseq
        %v1208 = vshrl.u32 %v1207, 7
        %v1209 = vsub.s32 %v1206, %v1208
        %v1210 = vrot.slane %v1162, %v1209
        %v1213 = vunpack.c.l.s4 1983009808
        %v1214 = vunpack.c.0.s8 %v1213
        %v1215 = vlaneseq
        %v1216 = vshrl.u32 %v1215, 7
        %v1217 = vsub.s32 %v1214, %v1216
        %v1218 = vrot.slane %v1168, %v1217
        %v1219 = vcombine.low %v1210, %v1218
        %v1220 = vcombine.high %v1210, %v1218
        %v1222 = vunpack.c.l.s4 1934713408
        %v1223 = vunpack.c.0.s8 %v1222
        %v1224 = vlaneseq
        %v1225 = vshrl.u32 %v1224, 7
        %v1226 = vsub.s32 %v1223, %v1225
        %v1227 = vrot.slane %v1219, %v1226
        %v1229 = vunpack.c.l.s4 1934713408
        %v1230 = vunpack.c.0.s8 %v1229
        %v1231 = vlaneseq
        %v1232 = vshrl.u32 %v1231, 7
        %v1233 = vsub.s32 %v1230, %v1232
        %v1234 = vrot.slane %v1220, %v1233
        %v1235 = vcombine.high %v1227, 0
        %v1236 = vcombine.high %v1234, 0
        %v1237 = vcombine.low %v1193, %v1200
        %v1239 = vunpack.c.l.s4 1983009808
        %v1240 = vunpack.c.0.s8 %v1239
        %v1241 = vlaneseq
        %v1242 = vshrl.u32 %v1241, 7
        %v1243 = vsub.s32 %v1240, %v1242
        %v1244 = vrot.slane %v1237, %v1243
        %v1245 = vcombine.low %v1201, %v1202
        %v1247 = vunpack.c.l.s4 1983009808
        %v1248 = vunpack.c.0.s8 %v1247
        %v1249 = vlaneseq
        %v1250 = vshrl.u32 %v1249, 7
        %v1251 = vsub.s32 %v1248, %v1250
        %v1252 = vrot.slane %v1245, %v1251
        %v1253 = vcombine.low %v1244, %v1252
        %v1255 = vunpack.c.l.s4 1934713408
        %v1256 = vunpack.c.0.s8 %v1255
        %v1257 = vlaneseq
        %v1258 = vshrl.u32 %v1257, 7
        %v1259 = vsub.s32 %v1256, %v1258
        %v1260 = vrot.slane %v1253, %v1259
        %v1261 = vcombine.high %v1260, 0
        %v1262 = vcombine.low %v1227, %v1234
        %v1264 = vunpack.c.l.s4 1983009808
        %v1265 = vunpack.c.0.s8 %v1264
        %v1266 = vlaneseq
        %v1267 = vshrl.u32 %v1266, 7
        %v1268 = vsub.s32 %v1265, %v1267
        %v1269 = vrot.slane %v1262, %v1268
        %v1270 = vcombine.low %v1235, %v1236
        %v1272 = vunpack.c.l.s4 1983009808
        %v1273 = vunpack.c.0.s8 %v1272
        %v1274 = vlaneseq
        %v1275 = vshrl.u32 %v1274, 7
        %v1276 = vsub.s32 %v1273, %v1275
        %v1277 = vrot.slane %v1270, %v1276
        %v1278 = vcombine.low %v1269, %v1277
        %v1280 = vunpack.c.l.s4 1934713408
        %v1281 = vunpack.c.0.s8 %v1280
        %v1282 = vlaneseq
        %v1283 = vshrl.u32 %v1282, 7
        %v1284 = vsub.s32 %v1281, %v1283
        %v1285 = vrot.slane %v1278, %v1284
        %v1286 = vcombine.high %v1285, 0
        %v1289 = vpack.i.b16 %v1285, %v1260
        %v1290 = vshrl.u32 %v1260, 16
        %v1291 = vshrl.u32 %v1285, 16
        %v1292 = vpack.i.b16 %v1291, %v1290
        %v1295 = vpack.i.b16 %v1286, %v1261
        %v1296 = vshrl.u32 %v1261, 16
        %v1297 = vshrl.u32 %v1286, 16
        %v1298 = vpack.i.b16 %v1297, %v1296
        %v1299 = vpack.c.bf16 %v1133, %v1133
        %v1300 = vpack.c.bf16 %v1135, %v1135
        %v1301 = vpack.c.bf16 %v1137, %v1137
        %v1302 = vpack.c.bf16 %v1139, %v1139
        %v1304 = vsel %vm911, %v1299, 0
        %vm1306 = vcmask 1043456
        %v1308 = vsel %vm1306, %v1289, 0
        %1310 = vmatprep.subr.bf16.mxu0 0
        %1311 = vmatpush1.bf16.msra.mxu0 %v1308
        %1312 = vmatprep.subr.bf16.mxu0 0
        %1313 = vmatpush1.bf16.msra.mxu0 0
        %1314 = vmatprep.subr.bf16.mxu0 0
        %1315 = vmatpush1.bf16.msra.mxu0 0
        %1316 = vmatprep.subr.bf16.mxu0 0
        %1317 = vmatpush1.bf16.msra.mxu0 0
        %1318 = vmatprep.subr.bf16.mxu0 0
        %1319 = vmatpush1.bf16.msra.mxu0 0
        %1320 = vmatprep.subr.bf16.mxu0 0
        %1321 = vmatpush1.bf16.msra.mxu0 0
        %1322 = vmatprep.subr.bf16.mxu0 0
        %1323 = vmatpush1.bf16.msra.mxu0 0
        %1324 = vmatprep.subr.bf16.mxu0 0
        %1325 = vmatpush1.bf16.msra.mxu0 0
        %1326 = vmatprep.subr.bf16.mxu0 0
        %1327 = vmatpush1.bf16.msra.mxu0 0
        %1328 = vmatprep.subr.bf16.mxu0 0
        %1329 = vmatpush1.bf16.msra.mxu0 0
        %1330 = vmatprep.subr.bf16.mxu0 0
        %1331 = vmatpush1.bf16.msra.mxu0 0
        %1332 = vmatprep.subr.bf16.mxu0 0
        %1333 = vmatpush1.bf16.msra.mxu0 0
        %1334 = vmatprep.subr.bf16.mxu0 0
        %1335 = vmatpush1.bf16.msra.mxu0 0
        %1336 = vmatprep.subr.bf16.mxu0 0
        %1337 = vmatpush1.bf16.msra.mxu0 0
        %1338 = vmatprep.subr.bf16.mxu0 0
        %1339 = vmatpush1.bf16.msra.mxu0 0
        %1340 = vmatprep.subr.bf16.mxu0 0
        %1341 = vmatpush1.bf16.msra.mxu0 0
        %1342 = vmatprep.mubr.bf16.mxu0 0
        %1343 = vmatmul.mubr.bf16.gmra.mrb[0].mxu0 %v1304
        %v1344 = vpop.f32.mrb[0].mxu0
        %v1345 = vadd.f32 0.0, %v1344
        %v1346 = vpop.f32.mrb[0].mxu0
        %v1347 = vpop.f32.mrb[0].mxu0
        %v1348 = vpop.f32.mrb[0].mxu0
        %1349 = vdwg.mxu0
        %v1351 = vsel %vm911, %v1300, 0
        %v1354 = vsel %vm1306, %v1292, 0
        %1356 = vmatprep.subr.bf16.mxu0 0
        %1357 = vmatpush1.bf16.msra.mxu0 %v1354
        %1358 = vmatprep.subr.bf16.mxu0 0
        %1359 = vmatpush1.bf16.msra.mxu0 0
        %1360 = vmatprep.subr.bf16.mxu0 0
        %1361 = vmatpush1.bf16.msra.mxu0 0
        %1362 = vmatprep.subr.bf16.mxu0 0
        %1363 = vmatpush1.bf16.msra.mxu0 0
        %1364 = vmatprep.subr.bf16.mxu0 0
        %1365 = vmatpush1.bf16.msra.mxu0 0
        %1366 = vmatprep.subr.bf16.mxu0 0
        %1367 = vmatpush1.bf16.msra.mxu0 0
        %1368 = vmatprep.subr.bf16.mxu0 0
        %1369 = vmatpush1.bf16.msra.mxu0 0
        %1370 = vmatprep.subr.bf16.mxu0 0
        %1371 = vmatpush1.bf16.msra.mxu0 0
        %1372 = vmatprep.subr.bf16.mxu0 0
        %1373 = vmatpush1.bf16.msra.mxu0 0
        %1374 = vmatprep.subr.bf16.mxu0 0
        %1375 = vmatpush1.bf16.msra.mxu0 0
        %1376 = vmatprep.subr.bf16.mxu0 0
        %1377 = vmatpush1.bf16.msra.mxu0 0
        %1378 = vmatprep.subr.bf16.mxu0 0
        %1379 = vmatpush1.bf16.msra.mxu0 0
        %1380 = vmatprep.subr.bf16.mxu0 0
        %1381 = vmatpush1.bf16.msra.mxu0 0
        %1382 = vmatprep.subr.bf16.mxu0 0
        %1383 = vmatpush1.bf16.msra.mxu0 0
        %1384 = vmatprep.subr.bf16.mxu0 0
        %1385 = vmatpush1.bf16.msra.mxu0 0
        %1386 = vmatprep.subr.bf16.mxu0 0
        %1387 = vmatpush1.bf16.msra.mxu0 0
        %1388 = vmatprep.mubr.bf16.mxu0 0
        %1389 = vmatmul.mubr.bf16.gmra.mrb[0].mxu0 %v1351
        %v1390 = vpop.f32.mrb[0].mxu0
        %v1391 = vadd.f32 0.0, %v1390
        %v1392 = vpop.f32.mrb[0].mxu0
        %v1393 = vpop.f32.mrb[0].mxu0
        %v1394 = vpop.f32.mrb[0].mxu0
        %1395 = vdwg.mxu0
        %v1397 = vsel %vm911, %v1301, 0
        %v1400 = vsel %vm1306, %v1295, 0
        %1402 = vmatprep.subr.bf16.mxu0 0
        %1403 = vmatpush1.bf16.msra.mxu0 %v1400
        %1404 = vmatprep.subr.bf16.mxu0 0
        %1405 = vmatpush1.bf16.msra.mxu0 0
        %1406 = vmatprep.subr.bf16.mxu0 0
        %1407 = vmatpush1.bf16.msra.mxu0 0
        %1408 = vmatprep.subr.bf16.mxu0 0
        %1409 = vmatpush1.bf16.msra.mxu0 0
        %1410 = vmatprep.subr.bf16.mxu0 0
        %1411 = vmatpush1.bf16.msra.mxu0 0
        %1412 = vmatprep.subr.bf16.mxu0 0
        %1413 = vmatpush1.bf16.msra.mxu0 0
        %1414 = vmatprep.subr.bf16.mxu0 0
        %1415 = vmatpush1.bf16.msra.mxu0 0
        %1416 = vmatprep.subr.bf16.mxu0 0
        %1417 = vmatpush1.bf16.msra.mxu0 0
        %1418 = vmatprep.subr.bf16.mxu0 0
        %1419 = vmatpush1.bf16.msra.mxu0 0
        %1420 = vmatprep.subr.bf16.mxu0 0
        %1421 = vmatpush1.bf16.msra.mxu0 0
        %1422 = vmatprep.subr.bf16.mxu0 0
        %1423 = vmatpush1.bf16.msra.mxu0 0
        %1424 = vmatprep.subr.bf16.mxu0 0
        %1425 = vmatpush1.bf16.msra.mxu0 0
        %1426 = vmatprep.subr.bf16.mxu0 0
        %1427 = vmatpush1.bf16.msra.mxu0 0
        %1428 = vmatprep.subr.bf16.mxu0 0
        %1429 = vmatpush1.bf16.msra.mxu0 0
        %1430 = vmatprep.subr.bf16.mxu0 0
        %1431 = vmatpush1.bf16.msra.mxu0 0
        %1432 = vmatprep.subr.bf16.mxu0 0
        %1433 = vmatpush1.bf16.msra.mxu0 0
        %1434 = vmatprep.mubr.bf16.mxu0 0
        %1435 = vmatmul.mubr.bf16.gmra.mrb[0].mxu0 %v1397
        %v1436 = vpop.f32.mrb[0].mxu0
        %v1437 = vadd.f32 0.0, %v1436
        %v1438 = vpop.f32.mrb[0].mxu0
        %v1439 = vpop.f32.mrb[0].mxu0
        %v1440 = vpop.f32.mrb[0].mxu0
        %1441 = vdwg.mxu0
        %v1443 = vsel %vm911, %v1302, 0
        %v1446 = vsel %vm1306, %v1298, 0
        %1448 = vmatprep.subr.bf16.mxu0 0
        %1449 = vmatpush1.bf16.msra.mxu0 %v1446
        %1450 = vmatprep.subr.bf16.mxu0 0
        %1451 = vmatpush1.bf16.msra.mxu0 0
        %1452 = vmatprep.subr.bf16.mxu0 0
        %1453 = vmatpush1.bf16.msra.mxu0 0
        %1454 = vmatprep.subr.bf16.mxu0 0
        %1455 = vmatpush1.bf16.msra.mxu0 0
        %1456 = vmatprep.subr.bf16.mxu0 0
        %1457 = vmatpush1.bf16.msra.mxu0 0
        %1458 = vmatprep.subr.bf16.mxu0 0
        %1459 = vmatpush1.bf16.msra.mxu0 0
        %1460 = vmatprep.subr.bf16.mxu0 0
        %1461 = vmatpush1.bf16.msra.mxu0 0
        %1462 = vmatprep.subr.bf16.mxu0 0
        %1463 = vmatpush1.bf16.msra.mxu0 0
        %1464 = vmatprep.subr.bf16.mxu0 0
        %1465 = vmatpush1.bf16.msra.mxu0 0
        %1466 = vmatprep.subr.bf16.mxu0 0
        %1467 = vmatpush1.bf16.msra.mxu0 0
        %1468 = vmatprep.subr.bf16.mxu0 0
        %1469 = vmatpush1.bf16.msra.mxu0 0
        %1470 = vmatprep.subr.bf16.mxu0 0
        %1471 = vmatpush1.bf16.msra.mxu0 0
        %1472 = vmatprep.subr.bf16.mxu0 0
        %1473 = vmatpush1.bf16.msra.mxu0 0
        %1474 = vmatprep.subr.bf16.mxu0 0
        %1475 = vmatpush1.bf16.msra.mxu0 0
        %1476 = vmatprep.subr.bf16.mxu0 0
        %1477 = vmatpush1.bf16.msra.mxu0 0
        %1478 = vmatprep.subr.bf16.mxu0 0
        %1479 = vmatpush1.bf16.msra.mxu0 0
        %1480 = vmatprep.mubr.bf16.mxu0 0
        %1481 = vmatmul.mubr.bf16.gmra.mrb[0].mxu0 %v1443
        %v1482 = vpop.f32.mrb[0].mxu0
        %v1483 = vadd.f32 0.0, %v1482
        %v1484 = vpop.f32.mrb[0].mxu0
        %v1485 = vpop.f32.mrb[0].mxu0
        %v1486 = vpop.f32.mrb[0].mxu0
        %1487 = vdwg.mxu0
        %v1488 = vcombine.low %v1345, %v1437
        %v1489 = vcombine.high %v1345, %v1437
        %v1491 = vunpack.c.l.s4 1983009808
        %v1492 = vunpack.c.0.s8 %v1491
        %v1493 = vlaneseq
        %v1494 = vshrl.u32 %v1493, 7
        %v1495 = vsub.s32 %v1492, %v1494
        %v1496 = vrot.slane %v1488, %v1495
        %v1498 = vunpack.c.l.s4 1983009808
        %v1499 = vunpack.c.0.s8 %v1498
        %v1500 = vlaneseq
        %v1501 = vshrl.u32 %v1500, 7
        %v1502 = vsub.s32 %v1499, %v1501
        %v1503 = vrot.slane %v1489, %v1502
        %v1504 = vcombine.low %v1391, %v1483
        %v1505 = vcombine.high %v1391, %v1483
        %v1507 = vunpack.c.l.s4 1983009808
        %v1508 = vunpack.c.0.s8 %v1507
        %v1509 = vlaneseq
        %v1510 = vshrl.u32 %v1509, 7
        %v1511 = vsub.s32 %v1508, %v1510
        %v1512 = vrot.slane %v1504, %v1511
        %v1514 = vunpack.c.l.s4 1983009808
        %v1515 = vunpack.c.0.s8 %v1514
        %v1516 = vlaneseq
        %v1517 = vshrl.u32 %v1516, 7
        %v1518 = vsub.s32 %v1515, %v1517
        %v1519 = vrot.slane %v1505, %v1518
        %v1520 = vcombine.low %v1496, %v1512
        %v1521 = vcombine.high %v1496, %v1512
        %v1523 = vunpack.c.l.s4 1934713408
        %v1524 = vunpack.c.0.s8 %v1523
        %v1525 = vlaneseq
        %v1526 = vshrl.u32 %v1525, 7
        %v1527 = vsub.s32 %v1524, %v1526
        %v1528 = vrot.slane %v1520, %v1527
        %v1530 = vunpack.c.l.s4 1934713408
        %v1531 = vunpack.c.0.s8 %v1530
        %v1532 = vlaneseq
        %v1533 = vshrl.u32 %v1532, 7
        %v1534 = vsub.s32 %v1531, %v1533
        %v1535 = vrot.slane %v1521, %v1534
        %v1536 = vcombine.low %v1503, %v1519
        %v1537 = vcombine.high %v1503, %v1519
        %v1539 = vunpack.c.l.s4 1934713408
        %v1540 = vunpack.c.0.s8 %v1539
        %v1541 = vlaneseq
        %v1542 = vshrl.u32 %v1541, 7
        %v1543 = vsub.s32 %v1540, %v1542
        %v1544 = vrot.slane %v1536, %v1543
        %v1546 = vunpack.c.l.s4 1934713408
        %v1547 = vunpack.c.0.s8 %v1546
        %v1548 = vlaneseq
        %v1549 = vshrl.u32 %v1548, 7
        %v1550 = vsub.s32 %v1547, %v1549
        %v1551 = vrot.slane %v1537, %v1550
        %v1552 = vcombine.high %v1528, 0.0
        %v1553 = vcombine.high %v1535, 0.0
        %v1554 = vcombine.high %v1544, 0.0
        %v1555 = vcombine.high %v1551, 0.0
        %v1556 = vcombine.low %v1528, %v1535
        %v1558 = vunpack.c.l.s4 1983009808
        %v1559 = vunpack.c.0.s8 %v1558
        %v1560 = vlaneseq
        %v1561 = vshrl.u32 %v1560, 7
        %v1562 = vsub.s32 %v1559, %v1561
        %v1563 = vrot.slane %v1556, %v1562
        %v1564 = vcombine.low %v1552, %v1553
        %v1566 = vunpack.c.l.s4 1983009808
        %v1567 = vunpack.c.0.s8 %v1566
        %v1568 = vlaneseq
        %v1569 = vshrl.u32 %v1568, 7
        %v1570 = vsub.s32 %v1567, %v1569
        %v1571 = vrot.slane %v1564, %v1570
        %v1572 = vcombine.low %v1544, %v1551
        %v1574 = vunpack.c.l.s4 1983009808
        %v1575 = vunpack.c.0.s8 %v1574
        %v1576 = vlaneseq
        %v1577 = vshrl.u32 %v1576, 7
        %v1578 = vsub.s32 %v1575, %v1577
        %v1579 = vrot.slane %v1572, %v1578
        %v1580 = vcombine.low %v1554, %v1555
        %v1582 = vunpack.c.l.s4 1983009808
        %v1583 = vunpack.c.0.s8 %v1582
        %v1584 = vlaneseq
        %v1585 = vshrl.u32 %v1584, 7
        %v1586 = vsub.s32 %v1583, %v1585
        %v1587 = vrot.slane %v1580, %v1586
        %v1588 = vcombine.low %v1563, %v1571
        %v1589 = vcombine.high %v1563, %v1571
        %v1591 = vunpack.c.l.s4 1934713408
        %v1592 = vunpack.c.0.s8 %v1591
        %v1593 = vlaneseq
        %v1594 = vshrl.u32 %v1593, 7
        %v1595 = vsub.s32 %v1592, %v1594
        %v1596 = vrot.slane %v1588, %v1595
        %v1598 = vunpack.c.l.s4 1934713408
        %v1599 = vunpack.c.0.s8 %v1598
        %v1600 = vlaneseq
        %v1601 = vshrl.u32 %v1600, 7
        %v1602 = vsub.s32 %v1599, %v1601
        %v1603 = vrot.slane %v1589, %v1602
        %v1604 = vcombine.low %v1579, %v1587
        %v1605 = vcombine.high %v1579, %v1587
        %v1607 = vunpack.c.l.s4 1934713408
        %v1608 = vunpack.c.0.s8 %v1607
        %v1609 = vlaneseq
        %v1610 = vshrl.u32 %v1609, 7
        %v1611 = vsub.s32 %v1608, %v1610
        %v1612 = vrot.slane %v1604, %v1611
        %v1614 = vunpack.c.l.s4 1934713408
        %v1615 = vunpack.c.0.s8 %v1614
        %v1616 = vlaneseq
        %v1617 = vshrl.u32 %v1616, 7
        %v1618 = vsub.s32 %v1615, %v1617
        %v1619 = vrot.slane %v1605, %v1618
        %v1620 = vcombine.low %v1596, %v1612
        %v1621 = vcombine.high %v1596, %v1612
        %v1622 = vcombine.low %v1603, %v1619
        %v1623 = vcombine.high %v1603, %v1619
        %1625 = vrot.lane.b32.xlu0 %v1621, 8
        %v1626 = vpop.permute.xlu0 %1625
        %1629 = vrot.lane.b32.xlu0 %v1622, 16
        %v1630 = vpop.permute.xlu0 %1629
        %1633 = vrot.lane.b32.xlu0 %v1623, 24
        %v1634 = vpop.permute.xlu0 %1633
        %v1636 = vsel %vm911, %v1620, %v1626
        %vm1637 = vcmask 130048
        %v1638 = vsel %vm1637, %v1636, %v1630
        %vm1639 = vcmask 195584
        %v1640 = vsel %vm1639, %v1638, %v1634
        %v1641 = vpack.c.bf16 %v1640, %v1640
        %vm1642 = vcmask 257024
        %1643 = vst.msk [vmem:[%s412] sm:$0xf] %vm1642, %v1641
        %p1644 = scmp.lt.s32.totalorder %s27, 1
        %s1645 = scalar_select %p1644, %s27, 1
        %p1646 = scmp.lt.s32.totalorder %s28, 0
        %s1647 = scalar_select %p1646, %s28, 0
        %s1648 = sadd.s32 %s1647, %s1645
        %s1649 = smul.addr %s1648, 4
        %s1650 = scalar_lea.vmem %s7, %s1649
        %s1651 = sand.u32 %s247, 1
        %s1652 = scalar_lea.sflag [#allocation3], %s1651
        %s1653 = sand.u32 %s247, 1
        %s1654 = smul.addr %s1653, 8
        %s1655 = scalar_lea.vmem [#allocation2], %s1654
        // Predicated region
        $region49: #{multihead_attention_forward.4} parent=47 // pred_check
          %p1656 = pneg %p229
        $region50: #{multihead_attention_forward.4} parent=47 // pred_check_branch
          %1658 = sbr.rel (%p1656) target = $region52
        $region51: #{multihead_attention_forward.4} parent=47 // pred_region
          _
        $region52: #{multihead_attention_forward.4} parent=47 // pred_fallthru
          _
        // Predicated region
        $region53: #{multihead_attention_forward.4} parent=47 // pred_check
          %p1659 = pneg %p257
        $region54: #{multihead_attention_forward.4} parent=47 // pred_check_branch
          %1661 = sbr.rel (%p1659) target = $region56
        $region55: #{multihead_attention_forward.4} parent=47 // pred_region
          %s1663 = ssub.s32 128, 128
          %1664 = vsyncadd %s1652, %s1663
          %s1665 = sadd.s32 %s28, %s27
          %s1666 = smul.addr %s1665, 128
          %s1667 = scalar_lea.hbm %s8, %s1666
          %s1669 = sshll.u32 %s1655, 4
          %s1670 = int_to_ptr.vmem [resolvable:$true] %s1669
          %1672 = dma.vmem_to_hbm [thread:$0]  %s1670, 128, %s1667, %s1652
        $region56: #{multihead_attention_forward.4} parent=47 // pred_fallthru
          _
      $region48: #{multihead_attention_forward.4} parent=5 // pred_fallthru
        _
      %p1673 = scmp.le.s32.totalorder 2, %s18
      // Predicated region
      $region57: #{multihead_attention_forward.4} parent=5 // pred_check
        %p1674 = pneg %p1673
      $region58: #{multihead_attention_forward.4} parent=5 // pred_check_branch
        %1676 = sbr.rel (%p1674) target = $region60
      $region59: #{multihead_attention_forward.4} parent=5 // pred_region
        %s1677 = ssub.s32 %s18, 2
        // Predicated region
        $region61: #{multihead_attention_forward.4} parent=59 // pred_check
          %p1678 = pneg %p235
        $region62: #{multihead_attention_forward.4} parent=59 // pred_check_branch
          %1680 = sbr.rel (%p1678) target = $region64
        $region63: #{multihead_attention_forward.4} parent=59 // pred_region
          %p1681 = scmp.lt.s32.totalorder %s29, 1
          %s1682 = scalar_select %p1681, %s29, 1
          %p1683 = scmp.lt.s32.totalorder %s30, 0
          %s1684 = scalar_select %p1683, %s30, 0
          %s1685 = sadd.s32 %s1684, %s1682
          %s1686 = smul.addr %s1685, 4
          %s1687 = scalar_lea.vmem %s7, %s1686
        $region64: #{multihead_attention_forward.4} parent=59 // pred_fallthru
          _
        // Predicated region
        $region65: #{multihead_attention_forward.4} parent=59 // pred_check
          %p1688 = pneg %p263
        $region66: #{multihead_attention_forward.4} parent=59 // pred_check_branch
          %1690 = sbr.rel (%p1688) target = $region68
        $region67: #{multihead_attention_forward.4} parent=59 // pred_region
          %s1691 = sand.u32 %s248, 1
          %s1692 = scalar_lea.sflag [#allocation3], %s1691
          %s1693 = sand.u32 %s248, 1
          %s1694 = smul.addr %s1693, 8
          %s1695 = scalar_lea.vmem [#allocation2], %s1694
          %1696 = dma.done %s1692, 128
        $region68: #{multihead_attention_forward.4} parent=59 // pred_fallthru
          _
      $region60: #{multihead_attention_forward.4} parent=5 // pred_fallthru
        _
    $region6: #{multihead_attention_forward.4} parent=1 // loop_footer
      %s22 = sadd.s32 1, %s18
    $region7: #{multihead_attention_forward.4} parent=1 // loop_footer_branch
      %17 = sbr.rel target = $region3
    $region8: #{multihead_attention_forward.4} parent=1 // loop_exit
      _
    %1697 = vsyncpa [#allocation3], 1
    %s1698 = scalar_lea.sflag [#allocation3], 1
    %1699 = vsyncpa %s1698, 1

</llo_original>
